<compile_context>
chip_gen: v5e
topology: v5e:2x2
jax: 0.10.0
libtpu: 0.0.40
codegen_flags: <defaults>
</compile_context>

<pallas_src>
from math import sqrt

import numpy as np

import jax
import jax.numpy as jnp
from jax import lax
from jax.experimental import pallas as pl
from jax.experimental.pallas import tpu as pltpu


def _leaky(x, slope=0.2):
    return jnp.where(x > 0, x, slope * x)


def _default_num_slabs(D, HW):
    """Smallest slab (most grid steps -> best DMA overlap / VMEM bound) whose
    lane extent stays in the ~85%-of-roofline regime (>= 64K lane elements)
    and is 128-lane aligned.  Falls back to 1 slab for small volumes."""
    best = 1
    for ns in range(2, D + 1):
        if D % ns:
            continue
        sd = D // ns
        if (sd * HW) % 128 or sd * HW < 64 * 1024:
            continue
        best = ns
    return best


def _inplane_masks(SD, H, W):
    """(9, (SD+2)*H*W) f32: 1 where the (kh,kw) in-plane tap source is within
    the H x W plane (period H*W along the flat lane axis).  Depth is handled
    by the slab halo, so no depth masks are needed."""
    HW = H * W
    L = (SD + 2) * HW
    p = np.arange(L)
    h = (p // W) % H
    w = p % W
    ms = []
    for oh in (-1, 0, 1):
        for ow in (-1, 0, 1):
            m = ((h + oh >= 0) & (h + oh < H) &
                 (w + ow >= 0) & (w + ow < W))
            ms.append(m.astype(np.float32))
    return np.stack(ms)


def _make_kernel(C, C2, H, W, SD):
    HW = H * W
    L_slab = SD * HW
    L_halo = (SD + 2) * HW

    def kernel(x_ref, w1_ref, w2_ref, w3_ref, mask_ref, o_ref):
        s = pl.program_id(1)
        base = s * L_slab
        if L_slab % 128 == 0:
            base = pl.multiple_of(base, 128)

        # Haloed input slab (f32): padded planes [s*SD, s*SD + SD + 2).  Halo
        # planes are either real neighbours or the wrapper's zero padding.
        xh = x_ref[0, :, pl.ds(base, L_halo)]                       # (C, L_halo)

        # ---- conv1 (1x1x1) + LeakyReLU: bf16 MXU operands, f32 accumulate --
        r1 = _leaky(jnp.dot(w1_ref[...], xh.astype(jnp.bfloat16),
                            preferred_element_type=jnp.float32))    # (C2, L_halo)

        # ---- conv2 (3x3x3, pad=1) ------------------------------------------
        # 9 in-plane rolled+masked variants of r1 (XLU roll + one VPU mask
        # multiply each); each depth offset is a static slice of the haloed
        # buffer; 27 accumulating (C2,C2)@(C2,L_slab) MXU matmuls.
        acc = jnp.zeros((C2, L_slab), jnp.float32)
        for oh in (-1, 0, 1):
            for ow in (-1, 0, 1):
                sh = oh * W + ow
                if sh == 0:
                    rolled = r1
                else:
                    # rolled[p] = r1[(p + sh) mod L_halo]; wrap-around lanes
                    # are exactly the in-plane out-of-bounds ones (masked).
                    rolled = pltpu.roll(r1, shift=(-sh) % L_halo, axis=1)
                if oh == 0 and ow == 0:
                    v = rolled.astype(jnp.bfloat16)
                else:
                    j = (oh + 1) * 3 + (ow + 1)
                    v = (rolled * mask_ref[j:j + 1, :]).astype(jnp.bfloat16)
                for od in (-1, 0, 1):
                    t = (od + 1) * 9 + (oh + 1) * 3 + (ow + 1)
                    tap = v[:, (1 + od) * HW:(1 + od) * HW + L_slab]
                    acc += jnp.dot(w2_ref[t], tap,
                                   preferred_element_type=jnp.float32)
        r2 = _leaky(acc)                                            # (C2, L_slab)

        # ---- conv3 (1x1x1) + LeakyReLU --------------------------------------
        r3 = _leaky(jnp.dot(w3_ref[...], r2.astype(jnp.bfloat16),
                            preferred_element_type=jnp.float32))    # (C, L_slab)

        # ---- residual add (f32) ---------------------------------------------
        o_ref[0] = xh[:, HW:HW + L_slab] + r3

    return kernel


def residual_block(x_ncdhw, w1_oidhw, w2_oidhw, w3_oidhw, *, num_slabs=None):
    """x_ncdhw: (N, C, D, H, W) f32; weights in PyTorch OIDHW layout.

    Returns (N, C, D, H, W) f32.
    """
    N, C, D, H, W = x_ncdhw.shape
    C2 = w1_oidhw.shape[0]
    HW = H * W
    if num_slabs is None:
        num_slabs = _default_num_slabs(D, HW)
    if D % num_slabs:
        raise ValueError("num_slabs must divide D")
    SD = D // num_slabs
    L_slab = SD * HW
    if num_slabs > 1 and L_slab % 128:
        raise ValueError("slab lane extent (SD*H*W) must be a multiple of 128")

    # Weights in channels-first matmul form; bf16 for the MXU.
    w1 = w1_oidhw[:, :, 0, 0, 0].astype(jnp.bfloat16)               # (C2, C)
    # w2t[kd*9 + kh*3 + kw] = w2[:, :, kd, kh, kw]  -> (27, C2_out, C2_in)
    w2t = jnp.transpose(w2_oidhw, (2, 3, 4, 0, 1)).reshape(27, C2, C2)
    w2t = w2t.astype(jnp.bfloat16)
    w3 = w3_oidhw[:, :, 0, 0, 0].astype(jnp.bfloat16)               # (C, C2)

    # Tiny grid-invariant in-plane masks (fetched once).
    masks = jnp.asarray(_inplane_masks(SD, H, W))                   # (9, L_halo)

    # One zero depth-plane halo on each side; flatten spatial onto lanes.
    xp = jnp.pad(x_ncdhw, ((0, 0), (0, 0), (1, 1), (0, 0), (0, 0)))
    xp = xp.reshape(N, C, (D + 2) * HW)

    kernel = _make_kernel(C, C2, H, W, SD)

    out = pl.pallas_call(
        kernel,
        out_shape=jax.ShapeDtypeStruct((N, C, D * HW), jnp.float32),
        grid_spec=pltpu.PrefetchScalarGridSpec(
            num_scalar_prefetch=0,
            grid=(N, num_slabs),
            in_specs=[
                # Full padded volume per batch element; block index is constant
                # across the slab axis so it is DMA'd once per n.
                pl.BlockSpec((1, C, (D + 2) * HW), lambda n, s: (n, 0, 0)),
                pl.BlockSpec((C2, C), lambda n, s: (0, 0)),
                pl.BlockSpec((27, C2, C2), lambda n, s: (0, 0, 0)),
                pl.BlockSpec((C, C2), lambda n, s: (0, 0)),
                pl.BlockSpec((9, (SD + 2) * HW), lambda n, s: (0, 0)),
            ],
            out_specs=pl.BlockSpec((1, C, L_slab), lambda n, s: (n, 0, s)),
        ),
        compiler_params=pltpu.CompilerParams(
            dimension_semantics=("parallel", "parallel"),
            vmem_limit_bytes=48 * 1024 * 1024),
    )(xp, w1, w2t, w3, masks)

    return out.reshape(N, C, D, H, W)


def reference_forward(x, w1_oidhw, w2_oidhw, w3_oidhw):
    dn = ("NCDHW", "OIDHW", "NCDHW")
    r = lax.conv_general_dilated(x, w1_oidhw, (1, 1, 1), "VALID",
                                 dimension_numbers=dn)
    r = _leaky(r)
    r = lax.conv_general_dilated(r, w2_oidhw, (1, 1, 1),
                                 [(1, 1), (1, 1), (1, 1)],
                                 dimension_numbers=dn)
    r = _leaky(r)
    r = lax.conv_general_dilated(r, w3_oidhw, (1, 1, 1), "VALID",
                                 dimension_numbers=dn)
    r = _leaky(r)
    return x + r


if __name__ == "__main__":
    # Small shapes: batch=2, indim=4, spatial D=H=W=8 (DHW = 512 lanes).
    N, C, D, H, W = 2, 4, 8, 8, 8
    C2 = 2 * C

    key = jax.random.PRNGKey(0)
    kx, k1, k2, k3 = jax.random.split(key, 4)

    x = jax.random.normal(kx, (N, C, D, H, W), dtype=jnp.float32)

    # Deterministic init mirroring the module: normal(0, sqrt(2/(kvol*out_ch))).
    std1 = sqrt(2.0 / (1 * 1 * 1 * C2))
    std2 = sqrt(2.0 / (3 * 3 * 3 * C2))
    std3 = sqrt(2.0 / (1 * 1 * 1 * C))
    w1_oidhw = std1 * jax.random.normal(k1, (C2, C, 1, 1, 1), dtype=jnp.float32)
    w2_oidhw = std2 * jax.random.normal(k2, (C2, C2, 3, 3, 3), dtype=jnp.float32)
    w3_oidhw = std3 * jax.random.normal(k3, (C, C2, 1, 1, 1), dtype=jnp.float32)

    # num_slabs=2 exercises the depth-slab + halo path at the toy shape.
    out = residual_block(x, w1_oidhw, w2_oidhw, w3_oidhw, num_slabs=2)
    out = jax.block_until_ready(out)

    ref = reference_forward(x, w1_oidhw, w2_oidhw, w3_oidhw)
    ref = jax.block_until_ready(ref)

    # bf16 MXU operands with f32 accumulation -> looser than pure-f32 tolerance.
    np.testing.assert_allclose(np.asarray(out), np.asarray(ref),
                               rtol=5e-2, atol=5e-2)
    print("KERNEL_OK")
</pallas_src>

<mosaic_0001>
module attributes {stable_mosaic.version = 11 : i64} {
  func.func @kernel(%arg0: i32, %arg1: i32, %arg2: memref<1x4x640xf32, #tpu.memory_space<vmem>>, %arg3: memref<8x4xbf16, #tpu.memory_space<vmem>>, %arg4: memref<27x8x8xbf16, #tpu.memory_space<vmem>>, %arg5: memref<4x8xbf16, #tpu.memory_space<vmem>>, %arg6: memref<9x384xf32, #tpu.memory_space<vmem>>, %arg7: memref<1x4x256xf32, #tpu.memory_space<vmem>>) attributes {dimension_semantics = [#tpu.dimension_semantics<parallel>, #tpu.dimension_semantics<parallel>], iteration_bounds = array<i64: 2, 2>, scalar_prefetch = 0 : i64, scratch_operands = 0 : i64, tpu.core_type = #tpu.core_type<tc>, window_params = [{transform_indices = @transform_0, window_bounds = array<i64: 1, 4, 640>}, {pipeline_mode = #tpu.pipeline_mode<synchronous>, transform_indices = @transform_1, window_bounds = array<i64: 8, 4>}, {pipeline_mode = #tpu.pipeline_mode<synchronous>, transform_indices = @transform_2, window_bounds = array<i64: 27, 8, 8>}, {pipeline_mode = #tpu.pipeline_mode<synchronous>, transform_indices = @transform_3, window_bounds = array<i64: 4, 8>}, {pipeline_mode = #tpu.pipeline_mode<synchronous>, transform_indices = @transform_4, window_bounds = array<i64: 9, 384>}, {transform_indices = @transform_5, window_bounds = array<i64: 1, 4, 256>}]} {
    %c256_i32 = arith.constant 256 : i32
    %0 = arith.muli %arg1, %c256_i32 : i32
    %1 = tpu.assume_multiple %0, 128 : i32
    %c0 = arith.constant 0 : index
    %c0_0 = arith.constant 0 : index
    %2 = arith.index_cast %1 : i32 to index
    %3 = vector.load %arg2[%c0, %c0_0, %2] : memref<1x4x640xf32, #tpu.memory_space<vmem>>, vector<1x4x384xf32>
    %4 = vector.shape_cast %3 : vector<1x4x384xf32> to vector<4x384xf32>
    %c0_1 = arith.constant 0 : index
    %c0_2 = arith.constant 0 : index
    %5 = vector.load %arg3[%c0_1, %c0_2] : memref<8x4xbf16, #tpu.memory_space<vmem>>, vector<8x4xbf16>
    %6 = arith.truncf %4 : vector<4x384xf32> to vector<4x384xbf16>
    %cst = arith.constant dense<0.000000e+00> : vector<8x384xf32>
    %7 = tpu.matmul %5, %6, %cst {dimension_numbers = #tpu.dot_dimension_numbers<[1], [0], [0], [1], [0, 0, 1, 1], [], []>} : vector<8x4xbf16>, vector<4x384xbf16>, vector<8x384xf32> -> vector<8x384xf32>
    %cst_3 = arith.constant 0.000000e+00 : f32
    %8 = vector.broadcast %cst_3 : f32 to vector<8x384xf32>
    %9 = arith.cmpf ogt, %7, %8 : vector<8x384xf32>
    %cst_4 = arith.constant 2.000000e-01 : f32
    %10 = vector.broadcast %cst_4 : f32 to vector<8x384xf32>
    %11 = arith.mulf %10, %7 : vector<8x384xf32>
    %12 = arith.select %9, %7, %11 : vector<8x384xi1>, vector<8x384xf32>
    %cst_5 = arith.constant 0.000000e+00 : f32
    %13 = vector.broadcast %cst_5 : f32 to vector<8x256xf32>
    %c9_i32 = arith.constant 9 : i32
    %14 = tpu.dynamic_rotate %12 by %c9_i32 dim 1 : vector<8x384xf32>, i32 -> vector<8x384xf32>
    %c0_6 = arith.constant 0 : index
    %c0_7 = arith.constant 0 : index
    %15 = vector.load %arg6[%c0_6, %c0_7] : memref<9x384xf32, #tpu.memory_space<vmem>>, vector<1x384xf32>
    %16 = vector.broadcast %15 : vector<1x384xf32> to vector<8x384xf32>
    %17 = arith.mulf %14, %16 : vector<8x384xf32>
    %18 = arith.truncf %17 : vector<8x384xf32> to vector<8x384xbf16>
    %19 = vector.extract_strided_slice %18 {offsets = [0, 0], sizes = [8, 256], strides = [1, 1]} : vector<8x384xbf16> to vector<8x256xbf16>
    %c0_8 = arith.constant 0 : index
    %c0_9 = arith.constant 0 : index
    %c0_10 = arith.constant 0 : index
    %20 = vector.load %arg4[%c0_8, %c0_9, %c0_10] : memref<27x8x8xbf16, #tpu.memory_space<vmem>>, vector<1x8x8xbf16>
    %21 = vector.shape_cast %20 : vector<1x8x8xbf16> to vector<8x8xbf16>
    %cst_11 = arith.constant dense<0.000000e+00> : vector<8x256xf32>
    %22 = tpu.matmul %21, %19, %cst_11 {dimension_numbers = #tpu.dot_dimension_numbers<[1], [0], [0], [1], [0, 0, 1, 1], [], []>} : vector<8x8xbf16>, vector<8x256xbf16>, vector<8x256xf32> -> vector<8x256xf32>
    %23 = arith.addf %13, %22 : vector<8x256xf32>
    %24 = vector.extract_strided_slice %18 {offsets = [0, 64], sizes = [8, 256], strides = [1, 1]} : vector<8x384xbf16> to vector<8x256xbf16>
    %c9 = arith.constant 9 : index
    %c0_12 = arith.constant 0 : index
    %c0_13 = arith.constant 0 : index
    %25 = vector.load %arg4[%c9, %c0_12, %c0_13] : memref<27x8x8xbf16, #tpu.memory_space<vmem>>, vector<1x8x8xbf16>
    %26 = vector.shape_cast %25 : vector<1x8x8xbf16> to vector<8x8xbf16>
    %cst_14 = arith.constant dense<0.000000e+00> : vector<8x256xf32>
    %27 = tpu.matmul %26, %24, %cst_14 {dimension_numbers = #tpu.dot_dimension_numbers<[1], [0], [0], [1], [0, 0, 1, 1], [], []>} : vector<8x8xbf16>, vector<8x256xbf16>, vector<8x256xf32> -> vector<8x256xf32>
    %28 = arith.addf %23, %27 : vector<8x256xf32>
    %29 = vector.extract_strided_slice %18 {offsets = [0, 128], sizes = [8, 256], strides = [1, 1]} : vector<8x384xbf16> to vector<8x256xbf16>
    %c18 = arith.constant 18 : index
    %c0_15 = arith.constant 0 : index
    %c0_16 = arith.constant 0 : index
    %30 = vector.load %arg4[%c18, %c0_15, %c0_16] : memref<27x8x8xbf16, #tpu.memory_space<vmem>>, vector<1x8x8xbf16>
    %31 = vector.shape_cast %30 : vector<1x8x8xbf16> to vector<8x8xbf16>
    %cst_17 = arith.constant dense<0.000000e+00> : vector<8x256xf32>
    %32 = tpu.matmul %31, %29, %cst_17 {dimension_numbers = #tpu.dot_dimension_numbers<[1], [0], [0], [1], [0, 0, 1, 1], [], []>} : vector<8x8xbf16>, vector<8x256xbf16>, vector<8x256xf32> -> vector<8x256xf32>
    %33 = arith.addf %28, %32 : vector<8x256xf32>
    %c8_i32 = arith.constant 8 : i32
    %34 = tpu.dynamic_rotate %12 by %c8_i32 dim 1 : vector<8x384xf32>, i32 -> vector<8x384xf32>
    %c1 = arith.constant 1 : index
    %c0_18 = arith.constant 0 : index
    %35 = vector.load %arg6[%c1, %c0_18] : memref<9x384xf32, #tpu.memory_space<vmem>>, vector<1x384xf32>
    %36 = vector.broadcast %35 : vector<1x384xf32> to vector<8x384xf32>
    %37 = arith.mulf %34, %36 : vector<8x384xf32>
    %38 = arith.truncf %37 : vector<8x384xf32> to vector<8x384xbf16>
    %39 = vector.extract_strided_slice %38 {offsets = [0, 0], sizes = [8, 256], strides = [1, 1]} : vector<8x384xbf16> to vector<8x256xbf16>
    %c1_19 = arith.constant 1 : index
    %c0_20 = arith.constant 0 : index
    %c0_21 = arith.constant 0 : index
    %40 = vector.load %arg4[%c1_19, %c0_20, %c0_21] : memref<27x8x8xbf16, #tpu.memory_space<vmem>>, vector<1x8x8xbf16>
    %41 = vector.shape_cast %40 : vector<1x8x8xbf16> to vector<8x8xbf16>
    %cst_22 = arith.constant dense<0.000000e+00> : vector<8x256xf32>
    %42 = tpu.matmul %41, %39, %cst_22 {dimension_numbers = #tpu.dot_dimension_numbers<[1], [0], [0], [1], [0, 0, 1, 1], [], []>} : vector<8x8xbf16>, vector<8x256xbf16>, vector<8x256xf32> -> vector<8x256xf32>
    %43 = arith.addf %33, %42 : vector<8x256xf32>
    %44 = vector.extract_strided_slice %38 {offsets = [0, 64], sizes = [8, 256], strides = [1, 1]} : vector<8x384xbf16> to vector<8x256xbf16>
    %c10 = arith.constant 10 : index
    %c0_23 = arith.constant 0 : index
    %c0_24 = arith.constant 0 : index
    %45 = vector.load %arg4[%c10, %c0_23, %c0_24] : memref<27x8x8xbf16, #tpu.memory_space<vmem>>, vector<1x8x8xbf16>
    %46 = vector.shape_cast %45 : vector<1x8x8xbf16> to vector<8x8xbf16>
    %cst_25 = arith.constant dense<0.000000e+00> : vector<8x256xf32>
    %47 = tpu.matmul %46, %44, %cst_25 {dimension_numbers = #tpu.dot_dimension_numbers<[1], [0], [0], [1], [0, 0, 1, 1], [], []>} : vector<8x8xbf16>, vector<8x256xbf16>, vector<8x256xf32> -> vector<8x256xf32>
    %48 = arith.addf %43, %47 : vector<8x256xf32>
    %49 = vector.extract_strided_slice %38 {offsets = [0, 128], sizes = [8, 256], strides = [1, 1]} : vector<8x384xbf16> to vector<8x256xbf16>
    %c19 = arith.constant 19 : index
    %c0_26 = arith.constant 0 : index
    %c0_27 = arith.constant 0 : index
    %50 = vector.load %arg4[%c19, %c0_26, %c0_27] : memref<27x8x8xbf16, #tpu.memory_space<vmem>>, vector<1x8x8xbf16>
    %51 = vector.shape_cast %50 : vector<1x8x8xbf16> to vector<8x8xbf16>
    %cst_28 = arith.constant dense<0.000000e+00> : vector<8x256xf32>
    %52 = tpu.matmul %51, %49, %cst_28 {dimension_numbers = #tpu.dot_dimension_numbers<[1], [0], [0], [1], [0, 0, 1, 1], [], []>} : vector<8x8xbf16>, vector<8x256xbf16>, vector<8x256xf32> -> vector<8x256xf32>
    %53 = arith.addf %48, %52 : vector<8x256xf32>
    %c7_i32 = arith.constant 7 : i32
    %54 = tpu.dynamic_rotate %12 by %c7_i32 dim 1 : vector<8x384xf32>, i32 -> vector<8x384xf32>
    %c2 = arith.constant 2 : index
    %c0_29 = arith.constant 0 : index
    %55 = vector.load %arg6[%c2, %c0_29] : memref<9x384xf32, #tpu.memory_space<vmem>>, vector<1x384xf32>
    %56 = vector.broadcast %55 : vector<1x384xf32> to vector<8x384xf32>
    %57 = arith.mulf %54, %56 : vector<8x384xf32>
    %58 = arith.truncf %57 : vector<8x384xf32> to vector<8x384xbf16>
    %59 = vector.extract_strided_slice %58 {offsets = [0, 0], sizes = [8, 256], strides = [1, 1]} : vector<8x384xbf16> to vector<8x256xbf16>
    %c2_30 = arith.constant 2 : index
    %c0_31 = arith.constant 0 : index
    %c0_32 = arith.constant 0 : index
    %60 = vector.load %arg4[%c2_30, %c0_31, %c0_32] : memref<27x8x8xbf16, #tpu.memory_space<vmem>>, vector<1x8x8xbf16>
    %61 = vector.shape_cast %60 : vector<1x8x8xbf16> to vector<8x8xbf16>
    %cst_33 = arith.constant dense<0.000000e+00> : vector<8x256xf32>
    %62 = tpu.matmul %61, %59, %cst_33 {dimension_numbers = #tpu.dot_dimension_numbers<[1], [0], [0], [1], [0, 0, 1, 1], [], []>} : vector<8x8xbf16>, vector<8x256xbf16>, vector<8x256xf32> -> vector<8x256xf32>
    %63 = arith.addf %53, %62 : vector<8x256xf32>
    %64 = vector.extract_strided_slice %58 {offsets = [0, 64], sizes = [8, 256], strides = [1, 1]} : vector<8x384xbf16> to vector<8x256xbf16>
    %c11 = arith.constant 11 : index
    %c0_34 = arith.constant 0 : index
    %c0_35 = arith.constant 0 : index
    %65 = vector.load %arg4[%c11, %c0_34, %c0_35] : memref<27x8x8xbf16, #tpu.memory_space<vmem>>, vector<1x8x8xbf16>
    %66 = vector.shape_cast %65 : vector<1x8x8xbf16> to vector<8x8xbf16>
    %cst_36 = arith.constant dense<0.000000e+00> : vector<8x256xf32>
    %67 = tpu.matmul %66, %64, %cst_36 {dimension_numbers = #tpu.dot_dimension_numbers<[1], [0], [0], [1], [0, 0, 1, 1], [], []>} : vector<8x8xbf16>, vector<8x256xbf16>, vector<8x256xf32> -> vector<8x256xf32>
    %68 = arith.addf %63, %67 : vector<8x256xf32>
    %69 = vector.extract_strided_slice %58 {offsets = [0, 128], sizes = [8, 256], strides = [1, 1]} : vector<8x384xbf16> to vector<8x256xbf16>
    %c20 = arith.constant 20 : index
    %c0_37 = arith.constant 0 : index
    %c0_38 = arith.constant 0 : index
    %70 = vector.load %arg4[%c20, %c0_37, %c0_38] : memref<27x8x8xbf16, #tpu.memory_space<vmem>>, vector<1x8x8xbf16>
    %71 = vector.shape_cast %70 : vector<1x8x8xbf16> to vector<8x8xbf16>
    %cst_39 = arith.constant dense<0.000000e+00> : vector<8x256xf32>
    %72 = tpu.matmul %71, %69, %cst_39 {dimension_numbers = #tpu.dot_dimension_numbers<[1], [0], [0], [1], [0, 0, 1, 1], [], []>} : vector<8x8xbf16>, vector<8x256xbf16>, vector<8x256xf32> -> vector<8x256xf32>
    %73 = arith.addf %68, %72 : vector<8x256xf32>
    %c1_i32 = arith.constant 1 : i32
    %74 = tpu.dynamic_rotate %12 by %c1_i32 dim 1 : vector<8x384xf32>, i32 -> vector<8x384xf32>
    %c3 = arith.constant 3 : index
    %c0_40 = arith.constant 0 : index
    %75 = vector.load %arg6[%c3, %c0_40] : memref<9x384xf32, #tpu.memory_space<vmem>>, vector<1x384xf32>
    %76 = vector.broadcast %75 : vector<1x384xf32> to vector<8x384xf32>
    %77 = arith.mulf %74, %76 : vector<8x384xf32>
    %78 = arith.truncf %77 : vector<8x384xf32> to vector<8x384xbf16>
    %79 = vector.extract_strided_slice %78 {offsets = [0, 0], sizes = [8, 256], strides = [1, 1]} : vector<8x384xbf16> to vector<8x256xbf16>
    %c3_41 = arith.constant 3 : index
    %c0_42 = arith.constant 0 : index
    %c0_43 = arith.constant 0 : index
    %80 = vector.load %arg4[%c3_41, %c0_42, %c0_43] : memref<27x8x8xbf16, #tpu.memory_space<vmem>>, vector<1x8x8xbf16>
    %81 = vector.shape_cast %80 : vector<1x8x8xbf16> to vector<8x8xbf16>
    %cst_44 = arith.constant dense<0.000000e+00> : vector<8x256xf32>
    %82 = tpu.matmul %81, %79, %cst_44 {dimension_numbers = #tpu.dot_dimension_numbers<[1], [0], [0], [1], [0, 0, 1, 1], [], []>} : vector<8x8xbf16>, vector<8x256xbf16>, vector<8x256xf32> -> vector<8x256xf32>
    %83 = arith.addf %73, %82 : vector<8x256xf32>
    %84 = vector.extract_strided_slice %78 {offsets = [0, 64], sizes = [8, 256], strides = [1, 1]} : vector<8x384xbf16> to vector<8x256xbf16>
    %c12 = arith.constant 12 : index
    %c0_45 = arith.constant 0 : index
    %c0_46 = arith.constant 0 : index
    %85 = vector.load %arg4[%c12, %c0_45, %c0_46] : memref<27x8x8xbf16, #tpu.memory_space<vmem>>, vector<1x8x8xbf16>
    %86 = vector.shape_cast %85 : vector<1x8x8xbf16> to vector<8x8xbf16>
    %cst_47 = arith.constant dense<0.000000e+00> : vector<8x256xf32>
    %87 = tpu.matmul %86, %84, %cst_47 {dimension_numbers = #tpu.dot_dimension_numbers<[1], [0], [0], [1], [0, 0, 1, 1], [], []>} : vector<8x8xbf16>, vector<8x256xbf16>, vector<8x256xf32> -> vector<8x256xf32>
    %88 = arith.addf %83, %87 : vector<8x256xf32>
    %89 = vector.extract_strided_slice %78 {offsets = [0, 128], sizes = [8, 256], strides = [1, 1]} : vector<8x384xbf16> to vector<8x256xbf16>
    %c21 = arith.constant 21 : index
    %c0_48 = arith.constant 0 : index
    %c0_49 = arith.constant 0 : index
    %90 = vector.load %arg4[%c21, %c0_48, %c0_49] : memref<27x8x8xbf16, #tpu.memory_space<vmem>>, vector<1x8x8xbf16>
    %91 = vector.shape_cast %90 : vector<1x8x8xbf16> to vector<8x8xbf16>
    %cst_50 = arith.constant dense<0.000000e+00> : vector<8x256xf32>
    %92 = tpu.matmul %91, %89, %cst_50 {dimension_numbers = #tpu.dot_dimension_numbers<[1], [0], [0], [1], [0, 0, 1, 1], [], []>} : vector<8x8xbf16>, vector<8x256xbf16>, vector<8x256xf32> -> vector<8x256xf32>
    %93 = arith.addf %88, %92 : vector<8x256xf32>
    %94 = arith.truncf %12 : vector<8x384xf32> to vector<8x384xbf16>
    %95 = vector.extract_strided_slice %94 {offsets = [0, 0], sizes = [8, 256], strides = [1, 1]} : vector<8x384xbf16> to vector<8x256xbf16>
    %c4 = arith.constant 4 : index
    %c0_51 = arith.constant 0 : index
    %c0_52 = arith.constant 0 : index
    %96 = vector.load %arg4[%c4, %c0_51, %c0_52] : memref<27x8x8xbf16, #tpu.memory_space<vmem>>, vector<1x8x8xbf16>
    %97 = vector.shape_cast %96 : vector<1x8x8xbf16> to vector<8x8xbf16>
    %cst_53 = arith.constant dense<0.000000e+00> : vector<8x256xf32>
    %98 = tpu.matmul %97, %95, %cst_53 {dimension_numbers = #tpu.dot_dimension_numbers<[1], [0], [0], [1], [0, 0, 1, 1], [], []>} : vector<8x8xbf16>, vector<8x256xbf16>, vector<8x256xf32> -> vector<8x256xf32>
    %99 = arith.addf %93, %98 : vector<8x256xf32>
    %100 = vector.extract_strided_slice %94 {offsets = [0, 64], sizes = [8, 256], strides = [1, 1]} : vector<8x384xbf16> to vector<8x256xbf16>
    %c13 = arith.constant 13 : index
    %c0_54 = arith.constant 0 : index
    %c0_55 = arith.constant 0 : index
    %101 = vector.load %arg4[%c13, %c0_54, %c0_55] : memref<27x8x8xbf16, #tpu.memory_space<vmem>>, vector<1x8x8xbf16>
    %102 = vector.shape_cast %101 : vector<1x8x8xbf16> to vector<8x8xbf16>
    %cst_56 = arith.constant dense<0.000000e+00> : vector<8x256xf32>
    %103 = tpu.matmul %102, %100, %cst_56 {dimension_numbers = #tpu.dot_dimension_numbers<[1], [0], [0], [1], [0, 0, 1, 1], [], []>} : vector<8x8xbf16>, vector<8x256xbf16>, vector<8x256xf32> -> vector<8x256xf32>
    %104 = arith.addf %99, %103 : vector<8x256xf32>
    %105 = vector.extract_strided_slice %94 {offsets = [0, 128], sizes = [8, 256], strides = [1, 1]} : vector<8x384xbf16> to vector<8x256xbf16>
    %c22 = arith.constant 22 : index
    %c0_57 = arith.constant 0 : index
    %c0_58 = arith.constant 0 : index
    %106 = vector.load %arg4[%c22, %c0_57, %c0_58] : memref<27x8x8xbf16, #tpu.memory_space<vmem>>, vector<1x8x8xbf16>
    %107 = vector.shape_cast %106 : vector<1x8x8xbf16> to vector<8x8xbf16>
    %cst_59 = arith.constant dense<0.000000e+00> : vector<8x256xf32>
    %108 = tpu.matmul %107, %105, %cst_59 {dimension_numbers = #tpu.dot_dimension_numbers<[1], [0], [0], [1], [0, 0, 1, 1], [], []>} : vector<8x8xbf16>, vector<8x256xbf16>, vector<8x256xf32> -> vector<8x256xf32>
    %109 = arith.addf %104, %108 : vector<8x256xf32>
    %c383_i32 = arith.constant 383 : i32
    %110 = tpu.dynamic_rotate %12 by %c383_i32 dim 1 : vector<8x384xf32>, i32 -> vector<8x384xf32>
    %c5 = arith.constant 5 : index
    %c0_60 = arith.constant 0 : index
    %111 = vector.load %arg6[%c5, %c0_60] : memref<9x384xf32, #tpu.memory_space<vmem>>, vector<1x384xf32>
    %112 = vector.broadcast %111 : vector<1x384xf32> to vector<8x384xf32>
    %113 = arith.mulf %110, %112 : vector<8x384xf32>
    %114 = arith.truncf %113 : vector<8x384xf32> to vector<8x384xbf16>
    %115 = vector.extract_strided_slice %114 {offsets = [0, 0], sizes = [8, 256], strides = [1, 1]} : vector<8x384xbf16> to vector<8x256xbf16>
    %c5_61 = arith.constant 5 : index
    %c0_62 = arith.constant 0 : index
    %c0_63 = arith.constant 0 : index
    %116 = vector.load %arg4[%c5_61, %c0_62, %c0_63] : memref<27x8x8xbf16, #tpu.memory_space<vmem>>, vector<1x8x8xbf16>
    %117 = vector.shape_cast %116 : vector<1x8x8xbf16> to vector<8x8xbf16>
    %cst_64 = arith.constant dense<0.000000e+00> : vector<8x256xf32>
    %118 = tpu.matmul %117, %115, %cst_64 {dimension_numbers = #tpu.dot_dimension_numbers<[1], [0], [0], [1], [0, 0, 1, 1], [], []>} : vector<8x8xbf16>, vector<8x256xbf16>, vector<8x256xf32> -> vector<8x256xf32>
    %119 = arith.addf %109, %118 : vector<8x256xf32>
    %120 = vector.extract_strided_slice %114 {offsets = [0, 64], sizes = [8, 256], strides = [1, 1]} : vector<8x384xbf16> to vector<8x256xbf16>
    %c14 = arith.constant 14 : index
    %c0_65 = arith.constant 0 : index
    %c0_66 = arith.constant 0 : index
    %121 = vector.load %arg4[%c14, %c0_65, %c0_66] : memref<27x8x8xbf16, #tpu.memory_space<vmem>>, vector<1x8x8xbf16>
    %122 = vector.shape_cast %121 : vector<1x8x8xbf16> to vector<8x8xbf16>
    %cst_67 = arith.constant dense<0.000000e+00> : vector<8x256xf32>
    %123 = tpu.matmul %122, %120, %cst_67 {dimension_numbers = #tpu.dot_dimension_numbers<[1], [0], [0], [1], [0, 0, 1, 1], [], []>} : vector<8x8xbf16>, vector<8x256xbf16>, vector<8x256xf32> -> vector<8x256xf32>
    %124 = arith.addf %119, %123 : vector<8x256xf32>
    %125 = vector.extract_strided_slice %114 {offsets = [0, 128], sizes = [8, 256], strides = [1, 1]} : vector<8x384xbf16> to vector<8x256xbf16>
    %c23 = arith.constant 23 : index
    %c0_68 = arith.constant 0 : index
    %c0_69 = arith.constant 0 : index
    %126 = vector.load %arg4[%c23, %c0_68, %c0_69] : memref<27x8x8xbf16, #tpu.memory_space<vmem>>, vector<1x8x8xbf16>
    %127 = vector.shape_cast %126 : vector<1x8x8xbf16> to vector<8x8xbf16>
    %cst_70 = arith.constant dense<0.000000e+00> : vector<8x256xf32>
    %128 = tpu.matmul %127, %125, %cst_70 {dimension_numbers = #tpu.dot_dimension_numbers<[1], [0], [0], [1], [0, 0, 1, 1], [], []>} : vector<8x8xbf16>, vector<8x256xbf16>, vector<8x256xf32> -> vector<8x256xf32>
    %129 = arith.addf %124, %128 : vector<8x256xf32>
    %c377_i32 = arith.constant 377 : i32
    %130 = tpu.dynamic_rotate %12 by %c377_i32 dim 1 : vector<8x384xf32>, i32 -> vector<8x384xf32>
    %c6 = arith.constant 6 : index
    %c0_71 = arith.constant 0 : index
    %131 = vector.load %arg6[%c6, %c0_71] : memref<9x384xf32, #tpu.memory_space<vmem>>, vector<1x384xf32>
    %132 = vector.broadcast %131 : vector<1x384xf32> to vector<8x384xf32>
    %133 = arith.mulf %130, %132 : vector<8x384xf32>
    %134 = arith.truncf %133 : vector<8x384xf32> to vector<8x384xbf16>
    %135 = vector.extract_strided_slice %134 {offsets = [0, 0], sizes = [8, 256], strides = [1, 1]} : vector<8x384xbf16> to vector<8x256xbf16>
    %c6_72 = arith.constant 6 : index
    %c0_73 = arith.constant 0 : index
    %c0_74 = arith.constant 0 : index
    %136 = vector.load %arg4[%c6_72, %c0_73, %c0_74] : memref<27x8x8xbf16, #tpu.memory_space<vmem>>, vector<1x8x8xbf16>
    %137 = vector.shape_cast %136 : vector<1x8x8xbf16> to vector<8x8xbf16>
    %cst_75 = arith.constant dense<0.000000e+00> : vector<8x256xf32>
    %138 = tpu.matmul %137, %135, %cst_75 {dimension_numbers = #tpu.dot_dimension_numbers<[1], [0], [0], [1], [0, 0, 1, 1], [], []>} : vector<8x8xbf16>, vector<8x256xbf16>, vector<8x256xf32> -> vector<8x256xf32>
    %139 = arith.addf %129, %138 : vector<8x256xf32>
    %140 = vector.extract_strided_slice %134 {offsets = [0, 64], sizes = [8, 256], strides = [1, 1]} : vector<8x384xbf16> to vector<8x256xbf16>
    %c15 = arith.constant 15 : index
    %c0_76 = arith.constant 0 : index
    %c0_77 = arith.constant 0 : index
    %141 = vector.load %arg4[%c15, %c0_76, %c0_77] : memref<27x8x8xbf16, #tpu.memory_space<vmem>>, vector<1x8x8xbf16>
    %142 = vector.shape_cast %141 : vector<1x8x8xbf16> to vector<8x8xbf16>
    %cst_78 = arith.constant dense<0.000000e+00> : vector<8x256xf32>
    %143 = tpu.matmul %142, %140, %cst_78 {dimension_numbers = #tpu.dot_dimension_numbers<[1], [0], [0], [1], [0, 0, 1, 1], [], []>} : vector<8x8xbf16>, vector<8x256xbf16>, vector<8x256xf32> -> vector<8x256xf32>
    %144 = arith.addf %139, %143 : vector<8x256xf32>
    %145 = vector.extract_strided_slice %134 {offsets = [0, 128], sizes = [8, 256], strides = [1, 1]} : vector<8x384xbf16> to vector<8x256xbf16>
    %c24 = arith.constant 24 : index
    %c0_79 = arith.constant 0 : index
    %c0_80 = arith.constant 0 : index
    %146 = vector.load %arg4[%c24, %c0_79, %c0_80] : memref<27x8x8xbf16, #tpu.memory_space<vmem>>, vector<1x8x8xbf16>
    %147 = vector.shape_cast %146 : vector<1x8x8xbf16> to vector<8x8xbf16>
    %cst_81 = arith.constant dense<0.000000e+00> : vector<8x256xf32>
    %148 = tpu.matmul %147, %145, %cst_81 {dimension_numbers = #tpu.dot_dimension_numbers<[1], [0], [0], [1], [0, 0, 1, 1], [], []>} : vector<8x8xbf16>, vector<8x256xbf16>, vector<8x256xf32> -> vector<8x256xf32>
    %149 = arith.addf %144, %148 : vector<8x256xf32>
    %c376_i32 = arith.constant 376 : i32
    %150 = tpu.dynamic_rotate %12 by %c376_i32 dim 1 : vector<8x384xf32>, i32 -> vector<8x384xf32>
    %c7 = arith.constant 7 : index
    %c0_82 = arith.constant 0 : index
    %151 = vector.load %arg6[%c7, %c0_82] : memref<9x384xf32, #tpu.memory_space<vmem>>, vector<1x384xf32>
    %152 = vector.broadcast %151 : vector<1x384xf32> to vector<8x384xf32>
    %153 = arith.mulf %150, %152 : vector<8x384xf32>
    %154 = arith.truncf %153 : vector<8x384xf32> to vector<8x384xbf16>
    %155 = vector.extract_strided_slice %154 {offsets = [0, 0], sizes = [8, 256], strides = [1, 1]} : vector<8x384xbf16> to vector<8x256xbf16>
    %c7_83 = arith.constant 7 : index
    %c0_84 = arith.constant 0 : index
    %c0_85 = arith.constant 0 : index
    %156 = vector.load %arg4[%c7_83, %c0_84, %c0_85] : memref<27x8x8xbf16, #tpu.memory_space<vmem>>, vector<1x8x8xbf16>
    %157 = vector.shape_cast %156 : vector<1x8x8xbf16> to vector<8x8xbf16>
    %cst_86 = arith.constant dense<0.000000e+00> : vector<8x256xf32>
    %158 = tpu.matmul %157, %155, %cst_86 {dimension_numbers = #tpu.dot_dimension_numbers<[1], [0], [0], [1], [0, 0, 1, 1], [], []>} : vector<8x8xbf16>, vector<8x256xbf16>, vector<8x256xf32> -> vector<8x256xf32>
    %159 = arith.addf %149, %158 : vector<8x256xf32>
    %160 = vector.extract_strided_slice %154 {offsets = [0, 64], sizes = [8, 256], strides = [1, 1]} : vector<8x384xbf16> to vector<8x256xbf16>
    %c16 = arith.constant 16 : index
    %c0_87 = arith.constant 0 : index
    %c0_88 = arith.constant 0 : index
    %161 = vector.load %arg4[%c16, %c0_87, %c0_88] : memref<27x8x8xbf16, #tpu.memory_space<vmem>>, vector<1x8x8xbf16>
    %162 = vector.shape_cast %161 : vector<1x8x8xbf16> to vector<8x8xbf16>
    %cst_89 = arith.constant dense<0.000000e+00> : vector<8x256xf32>
    %163 = tpu.matmul %162, %160, %cst_89 {dimension_numbers = #tpu.dot_dimension_numbers<[1], [0], [0], [1], [0, 0, 1, 1], [], []>} : vector<8x8xbf16>, vector<8x256xbf16>, vector<8x256xf32> -> vector<8x256xf32>
    %164 = arith.addf %159, %163 : vector<8x256xf32>
    %165 = vector.extract_strided_slice %154 {offsets = [0, 128], sizes = [8, 256], strides = [1, 1]} : vector<8x384xbf16> to vector<8x256xbf16>
    %c25 = arith.constant 25 : index
    %c0_90 = arith.constant 0 : index
    %c0_91 = arith.constant 0 : index
    %166 = vector.load %arg4[%c25, %c0_90, %c0_91] : memref<27x8x8xbf16, #tpu.memory_space<vmem>>, vector<1x8x8xbf16>
    %167 = vector.shape_cast %166 : vector<1x8x8xbf16> to vector<8x8xbf16>
    %cst_92 = arith.constant dense<0.000000e+00> : vector<8x256xf32>
    %168 = tpu.matmul %167, %165, %cst_92 {dimension_numbers = #tpu.dot_dimension_numbers<[1], [0], [0], [1], [0, 0, 1, 1], [], []>} : vector<8x8xbf16>, vector<8x256xbf16>, vector<8x256xf32> -> vector<8x256xf32>
    %169 = arith.addf %164, %168 : vector<8x256xf32>
    %c375_i32 = arith.constant 375 : i32
    %170 = tpu.dynamic_rotate %12 by %c375_i32 dim 1 : vector<8x384xf32>, i32 -> vector<8x384xf32>
    %c8 = arith.constant 8 : index
    %c0_93 = arith.constant 0 : index
    %171 = vector.load %arg6[%c8, %c0_93] : memref<9x384xf32, #tpu.memory_space<vmem>>, vector<1x384xf32>
    %172 = vector.broadcast %171 : vector<1x384xf32> to vector<8x384xf32>
    %173 = arith.mulf %170, %172 : vector<8x384xf32>
    %174 = arith.truncf %173 : vector<8x384xf32> to vector<8x384xbf16>
    %175 = vector.extract_strided_slice %174 {offsets = [0, 0], sizes = [8, 256], strides = [1, 1]} : vector<8x384xbf16> to vector<8x256xbf16>
    %c8_94 = arith.constant 8 : index
    %c0_95 = arith.constant 0 : index
    %c0_96 = arith.constant 0 : index
    %176 = vector.load %arg4[%c8_94, %c0_95, %c0_96] : memref<27x8x8xbf16, #tpu.memory_space<vmem>>, vector<1x8x8xbf16>
    %177 = vector.shape_cast %176 : vector<1x8x8xbf16> to vector<8x8xbf16>
    %cst_97 = arith.constant dense<0.000000e+00> : vector<8x256xf32>
    %178 = tpu.matmul %177, %175, %cst_97 {dimension_numbers = #tpu.dot_dimension_numbers<[1], [0], [0], [1], [0, 0, 1, 1], [], []>} : vector<8x8xbf16>, vector<8x256xbf16>, vector<8x256xf32> -> vector<8x256xf32>
    %179 = arith.addf %169, %178 : vector<8x256xf32>
    %180 = vector.extract_strided_slice %174 {offsets = [0, 64], sizes = [8, 256], strides = [1, 1]} : vector<8x384xbf16> to vector<8x256xbf16>
    %c17 = arith.constant 17 : index
    %c0_98 = arith.constant 0 : index
    %c0_99 = arith.constant 0 : index
    %181 = vector.load %arg4[%c17, %c0_98, %c0_99] : memref<27x8x8xbf16, #tpu.memory_space<vmem>>, vector<1x8x8xbf16>
    %182 = vector.shape_cast %181 : vector<1x8x8xbf16> to vector<8x8xbf16>
    %cst_100 = arith.constant dense<0.000000e+00> : vector<8x256xf32>
    %183 = tpu.matmul %182, %180, %cst_100 {dimension_numbers = #tpu.dot_dimension_numbers<[1], [0], [0], [1], [0, 0, 1, 1], [], []>} : vector<8x8xbf16>, vector<8x256xbf16>, vector<8x256xf32> -> vector<8x256xf32>
    %184 = arith.addf %179, %183 : vector<8x256xf32>
    %185 = vector.extract_strided_slice %174 {offsets = [0, 128], sizes = [8, 256], strides = [1, 1]} : vector<8x384xbf16> to vector<8x256xbf16>
    %c26 = arith.constant 26 : index
    %c0_101 = arith.constant 0 : index
    %c0_102 = arith.constant 0 : index
    %186 = vector.load %arg4[%c26, %c0_101, %c0_102] : memref<27x8x8xbf16, #tpu.memory_space<vmem>>, vector<1x8x8xbf16>
    %187 = vector.shape_cast %186 : vector<1x8x8xbf16> to vector<8x8xbf16>
    %cst_103 = arith.constant dense<0.000000e+00> : vector<8x256xf32>
    %188 = tpu.matmul %187, %185, %cst_103 {dimension_numbers = #tpu.dot_dimension_numbers<[1], [0], [0], [1], [0, 0, 1, 1], [], []>} : vector<8x8xbf16>, vector<8x256xbf16>, vector<8x256xf32> -> vector<8x256xf32>
    %189 = arith.addf %184, %188 : vector<8x256xf32>
    %cst_104 = arith.constant 0.000000e+00 : f32
    %190 = vector.broadcast %cst_104 : f32 to vector<8x256xf32>
    %191 = arith.cmpf ogt, %189, %190 : vector<8x256xf32>
    %cst_105 = arith.constant 2.000000e-01 : f32
    %192 = vector.broadcast %cst_105 : f32 to vector<8x256xf32>
    %193 = arith.mulf %192, %189 : vector<8x256xf32>
    %194 = arith.select %191, %189, %193 : vector<8x256xi1>, vector<8x256xf32>
    %c0_106 = arith.constant 0 : index
    %c0_107 = arith.constant 0 : index
    %195 = vector.load %arg5[%c0_106, %c0_107] : memref<4x8xbf16, #tpu.memory_space<vmem>>, vector<4x8xbf16>
    %196 = arith.truncf %194 : vector<8x256xf32> to vector<8x256xbf16>
    %cst_108 = arith.constant dense<0.000000e+00> : vector<4x256xf32>
    %197 = tpu.matmul %195, %196, %cst_108 {dimension_numbers = #tpu.dot_dimension_numbers<[1], [0], [0], [1], [0, 0, 1, 1], [], []>} : vector<4x8xbf16>, vector<8x256xbf16>, vector<4x256xf32> -> vector<4x256xf32>
    %cst_109 = arith.constant 0.000000e+00 : f32
    %198 = vector.broadcast %cst_109 : f32 to vector<4x256xf32>
    %199 = arith.cmpf ogt, %197, %198 : vector<4x256xf32>
    %cst_110 = arith.constant 2.000000e-01 : f32
    %200 = vector.broadcast %cst_110 : f32 to vector<4x256xf32>
    %201 = arith.mulf %200, %197 : vector<4x256xf32>
    %202 = arith.select %199, %197, %201 : vector<4x256xi1>, vector<4x256xf32>
    %203 = vector.extract_strided_slice %4 {offsets = [0, 64], sizes = [4, 256], strides = [1, 1]} : vector<4x384xf32> to vector<4x256xf32>
    %204 = arith.addf %203, %202 : vector<4x256xf32>
    %c0_111 = arith.constant 0 : index
    %c0_112 = arith.constant 0 : index
    %c0_113 = arith.constant 0 : index
    %205 = vector.load %arg7[%c0_111, %c0_112, %c0_113] : memref<1x4x256xf32, #tpu.memory_space<vmem>>, vector<1x4x256xf32>
    %206 = vector.shape_cast %205 : vector<1x4x256xf32> to vector<4x256xf32>
    %207 = vector.shape_cast %204 : vector<4x256xf32> to vector<1x4x256xf32>
    tpu.vector_store %arg7[%c0_111, %c0_112, %c0_113], %207 {strides = array<i32>} : memref<1x4x256xf32, #tpu.memory_space<vmem>>, vector<1x4x256xf32>,
    return
  }
  func.func @transform_0(%arg0: i32, %arg1: i32) -> (i32, i32, i32) {
    %c0_i32 = arith.constant 0 : i32
    %c0_i32_0 = arith.constant 0 : i32
    %c0_i32_1 = arith.constant 0 : i32
    return %arg0, %c0_i32, %c0_i32_0 : i32, i32, i32
  }
  func.func @transform_1(%arg0: i32, %arg1: i32) -> (i32, i32) {
    %c0_i32 = arith.constant 0 : i32
    %c0_i32_0 = arith.constant 0 : i32
    %c0_i32_1 = arith.constant 0 : i32
    return %c0_i32, %c0_i32_0 : i32, i32
  }
  func.func @transform_2(%arg0: i32, %arg1: i32) -> (i32, i32, i32) {
    %c0_i32 = arith.constant 0 : i32
    %c0_i32_0 = arith.constant 0 : i32
    %c0_i32_1 = arith.constant 0 : i32
    %c0_i32_2 = arith.constant 0 : i32
    return %c0_i32, %c0_i32_0, %c0_i32_1 : i32, i32, i32
  }
  func.func @transform_3(%arg0: i32, %arg1: i32) -> (i32, i32) {
    %c0_i32 = arith.constant 0 : i32
    %c0_i32_0 = arith.constant 0 : i32
    %c0_i32_1 = arith.constant 0 : i32
    return %c0_i32, %c0_i32_0 : i32, i32
  }
  func.func @transform_4(%arg0: i32, %arg1: i32) -> (i32, i32) {
    %c0_i32 = arith.constant 0 : i32
    %c0_i32_0 = arith.constant 0 : i32
    %c0_i32_1 = arith.constant 0 : i32
    return %c0_i32, %c0_i32_0 : i32, i32
  }
  func.func @transform_5(%arg0: i32, %arg1: i32) -> (i32, i32, i32) {
    %c0_i32 = arith.constant 0 : i32
    %c0_i32_0 = arith.constant 0 : i32
    return %arg0, %c0_i32, %arg1 : i32, i32, i32
  }
}

</mosaic_0001>

<llo_original>
// kernel: tpu_custom_call.1
$region0: #{tpu_custom_call.1}
  #allocation0 [shape = 'u32[]', space=smem, size = 0x4, offset = 0x4, fixed_abs, tag = 'smem constant byte address 0x4 - core index']
  #allocation1 [shape = 'u32[72,128]{1,0:T(1,128)}', space=vmem, size = 0x9000, scoped, tag = 'internal scratch']
  %s0 = inlined_call_operand.vmem [shape: f32[2,4,640], index: 0, kind: input, shape index: {}]
  %s1 = inlined_call_operand.vmem [shape: bf16[8,4], index: 1, kind: input, shape index: {}]
  %s2 = inlined_call_operand.vmem [shape: bf16[27,8,8], index: 2, kind: input, shape index: {}]
  %s3 = inlined_call_operand.vmem [shape: bf16[4,8], index: 3, kind: input, shape index: {}]
  %s4 = inlined_call_operand.vmem [shape: f32[9,384], index: 4, kind: input, shape index: {}]
  %s5 = inlined_call_operand.hbm [shape: f32[2,4,512], index: 5, kind: output, shape index: {}]
  %s6 = sld [smem:[#allocation0]]
  $region53: #{tpu_custom_call.1} parent=0
    _
  %s8 = ssub.s32 1, %s6
  %s9 = scalar_select 0, %s8, %s6
  $region1: #{tpu_custom_call.1} parent=0
    #allocation2 [shape = 'u8[8192]{0}', space=vmem, size = 0x2000, scoped, tag = 'output window, operand 0']
    #allocation3 [shape = 's32[2]{0}', space=sflag, size = 0x8, scoped, tag = 'scoped memory for tpu_custom_call.1']
    %10 = vsyncpa [#allocation3], 0
    %s11 = scalar_lea.sflag [#allocation3], 1
    %12 = vsyncpa %s11, 0
    loop: start=0, step=1, limit=6
    $region2: #{tpu_custom_call.1} parent=1 // loop_pre_header
      _
    $region3: #{tpu_custom_call.1} parent=1 // loop_header
      %s14 = sphi 0, %s18
      %p15 = scmp.ge.s32.totalorder %s14, 6
      %s21 = sphi 0, %s33
      %s22 = sphi 0, %s29
      %s23 = sphi 0, %s21
      %s24 = sphi 0, %s22
      %s25 = sphi 0, %s23
      %s26 = sphi 0, %s24
      %s36 = sphi 0, %s38
      %s39 = sphi 0, %s36
      %s40 = sphi 0, %s39
      %s56 = sphi 0, %s40
      %s60 = sphi 0, %s60
      %s62 = sphi 0, %s60
      %s63 = sphi 0, %s62
      %s77 = sphi 0, %s63
      %s81 = sphi 0, %s81
      %s83 = sphi 0, %s81
      %s84 = sphi 0, %s83
      %s98 = sphi 0, %s84
      %s102 = sphi 0, %s102
      %s104 = sphi 0, %s102
      %s105 = sphi 0, %s104
      %s119 = sphi 0, %s105
      %s123 = sphi 0, %s123
      %s125 = sphi 0, %s123
      %s126 = sphi 0, %s125
      %s140 = sphi 0, %s126
      %s148 = sphi 0, %s150
      %s151 = sphi 0, %s148
      %s152 = sphi 0, %s151
      %s168 = sphi 0, %s152
    $region4: #{tpu_custom_call.1} parent=1 // loop_header_branch
      %17 = sbr.rel (%p15) target = $region8
    $region5: #{tpu_custom_call.1} parent=1 // loop_body
      %s19 = ssub.s32 %s14, 1
      %s20 = ssub.s32 %s14, 2
      %s27 = sadd.s32 1, %s22
      %p28 = scmp.ge.s32.totalorder %s27, 2
      %s29 = scalar_select %p28, 0, %s27
      %s30 = sadd.s32 1, %s21
      %s31 = scalar_select %p28, %s30, %s21
      %p32 = scmp.ge.s32.totalorder %s31, 2
      %s33 = scalar_select %p32, 0, %s31
      %s34 = ssub.s32 %s21, %s33
      %p35 = scmp.eq.s32.totalorder %s34, 0
      %s37 = sadd.s32 %s36, 1
      %s38 = scalar_select %p35, %s36, %s37
      %p41 = pneg %p35
      %p42 = scmp.eq.s32.totalorder %s14, 3
      %p43 = por %p41, %p42
      %p44 = scmp.ne.s32.totalorder %s36, %s39
      %p45 = scmp.eq.s32.totalorder %s14, 0
      %p46 = por %p44, %p45
      %p47 = scmp.ne.s32.totalorder %s36, %s39
      %p48 = scmp.eq.s32.totalorder %s19, 3
      %p49 = por %p47, %p48
      %p50 = scmp.ne.s32.totalorder %s39, %s40
      %p51 = scmp.eq.s32.totalorder %s19, 0
      %p52 = por %p50, %p51
      %p53 = scmp.ne.s32.totalorder %s39, %s40
      %p54 = scmp.eq.s32.totalorder %s20, 3
      %p55 = por %p53, %p54
      %p57 = scmp.ne.s32.totalorder %s40, %s56
      %p58 = scmp.eq.s32.totalorder %s20, 0
      %p59 = por %p57, %p58
      %s61 = sadd.s32 %s60, 1
      %p64 = scmp.eq.s32.totalorder %s14, 3
      %p65 = scmp.ne.s32.totalorder %s60, %s62
      %p66 = scmp.eq.s32.totalorder %s14, 0
      %p67 = por %p65, %p66
      %p68 = scmp.ne.s32.totalorder %s60, %s62
      %p69 = scmp.eq.s32.totalorder %s19, 3
      %p70 = por %p68, %p69
      %p71 = scmp.ne.s32.totalorder %s62, %s63
      %p72 = scmp.eq.s32.totalorder %s19, 0
      %p73 = por %p71, %p72
      %p74 = scmp.ne.s32.totalorder %s62, %s63
      %p75 = scmp.eq.s32.totalorder %s20, 3
      %p76 = por %p74, %p75
      %p78 = scmp.ne.s32.totalorder %s63, %s77
      %p79 = scmp.eq.s32.totalorder %s20, 0
      %p80 = por %p78, %p79
      %s82 = sadd.s32 %s81, 1
      %p85 = scmp.eq.s32.totalorder %s14, 3
      %p86 = scmp.ne.s32.totalorder %s81, %s83
      %p87 = scmp.eq.s32.totalorder %s14, 0
      %p88 = por %p86, %p87
      %p89 = scmp.ne.s32.totalorder %s81, %s83
      %p90 = scmp.eq.s32.totalorder %s19, 3
      %p91 = por %p89, %p90
      %p92 = scmp.ne.s32.totalorder %s83, %s84
      %p93 = scmp.eq.s32.totalorder %s19, 0
      %p94 = por %p92, %p93
      %p95 = scmp.ne.s32.totalorder %s83, %s84
      %p96 = scmp.eq.s32.totalorder %s20, 3
      %p97 = por %p95, %p96
      %p99 = scmp.ne.s32.totalorder %s84, %s98
      %p100 = scmp.eq.s32.totalorder %s20, 0
      %p101 = por %p99, %p100
      %s103 = sadd.s32 %s102, 1
      %p106 = scmp.eq.s32.totalorder %s14, 3
      %p107 = scmp.ne.s32.totalorder %s102, %s104
      %p108 = scmp.eq.s32.totalorder %s14, 0
      %p109 = por %p107, %p108
      %p110 = scmp.ne.s32.totalorder %s102, %s104
      %p111 = scmp.eq.s32.totalorder %s19, 3
      %p112 = por %p110, %p111
      %p113 = scmp.ne.s32.totalorder %s104, %s105
      %p114 = scmp.eq.s32.totalorder %s19, 0
      %p115 = por %p113, %p114
      %p116 = scmp.ne.s32.totalorder %s104, %s105
      %p117 = scmp.eq.s32.totalorder %s20, 3
      %p118 = por %p116, %p117
      %p120 = scmp.ne.s32.totalorder %s105, %s119
      %p121 = scmp.eq.s32.totalorder %s20, 0
      %p122 = por %p120, %p121
      %s124 = sadd.s32 %s123, 1
      %p127 = scmp.eq.s32.totalorder %s14, 3
      %p128 = scmp.ne.s32.totalorder %s123, %s125
      %p129 = scmp.eq.s32.totalorder %s14, 0
      %p130 = por %p128, %p129
      %p131 = scmp.ne.s32.totalorder %s123, %s125
      %p132 = scmp.eq.s32.totalorder %s19, 3
      %p133 = por %p131, %p132
      %p134 = scmp.ne.s32.totalorder %s125, %s126
      %p135 = scmp.eq.s32.totalorder %s19, 0
      %p136 = por %p134, %p135
      %p137 = scmp.ne.s32.totalorder %s125, %s126
      %p138 = scmp.eq.s32.totalorder %s20, 3
      %p139 = por %p137, %p138
      %p141 = scmp.ne.s32.totalorder %s126, %s140
      %p142 = scmp.eq.s32.totalorder %s20, 0
      %p143 = por %p141, %p142
      %s144 = ssub.s32 %s21, %s33
      %s145 = ssub.s32 %s22, %s29
      %s146 = sor.u32 %s144, %s145
      %p147 = scmp.eq.s32.totalorder %s146, 0
      %s149 = sadd.s32 %s148, 1
      %s150 = scalar_select %p147, %s148, %s149
      %p153 = pneg %p147
      %p154 = scmp.eq.s32.totalorder %s14, 3
      %p155 = por %p153, %p154
      %p156 = scmp.ne.s32.totalorder %s148, %s151
      %p157 = scmp.eq.s32.totalorder %s14, 0
      %p158 = por %p156, %p157
      %p159 = scmp.ne.s32.totalorder %s148, %s151
      %p160 = scmp.eq.s32.totalorder %s19, 3
      %p161 = por %p159, %p160
      %p162 = scmp.ne.s32.totalorder %s151, %s152
      %p163 = scmp.eq.s32.totalorder %s19, 0
      %p164 = por %p162, %p163
      %p165 = scmp.ne.s32.totalorder %s151, %s152
      %p166 = scmp.eq.s32.totalorder %s20, 3
      %p167 = por %p165, %p166
      %p169 = scmp.ne.s32.totalorder %s152, %s168
      %p170 = scmp.eq.s32.totalorder %s20, 0
      %p171 = por %p169, %p170
      %p172 = scmp.le.s32.totalorder 1, %s14
      %p173 = scmp.lt.s32.totalorder %s14, 5
      %p174 = pnand %p172, %p173
      %p175 = pneg %p174
      // Predicated region
      $region9: #{tpu_custom_call.1} parent=5 // pred_check
        _
      $region10: #{tpu_custom_call.1} parent=5 // pred_check_branch
        %177 = sbr.rel (%p174) target = $region12
      $region11: #{tpu_custom_call.1} parent=5 // pred_region
        %s178 = ssub.s32 %s14, 1
        // Predicated region
        $region13: #{tpu_custom_call.1} parent=11 // pred_check
          %p179 = pneg %p73
        $region14: #{tpu_custom_call.1} parent=11 // pred_check_branch
          %181 = sbr.rel (%p179) target = $region16
        $region15: #{tpu_custom_call.1} parent=11 // pred_region
          _
        $region16: #{tpu_custom_call.1} parent=11 // pred_fallthru
          _
        // Predicated region
        $region17: #{tpu_custom_call.1} parent=11 // pred_check
          %p182 = pneg %p94
        $region18: #{tpu_custom_call.1} parent=11 // pred_check_branch
          %184 = sbr.rel (%p182) target = $region20
        $region19: #{tpu_custom_call.1} parent=11 // pred_region
          _
        $region20: #{tpu_custom_call.1} parent=11 // pred_fallthru
          _
        // Predicated region
        $region21: #{tpu_custom_call.1} parent=11 // pred_check
          %p185 = pneg %p115
        $region22: #{tpu_custom_call.1} parent=11 // pred_check_branch
          %187 = sbr.rel (%p185) target = $region24
        $region23: #{tpu_custom_call.1} parent=11 // pred_region
          _
        $region24: #{tpu_custom_call.1} parent=11 // pred_fallthru
          _
        // Predicated region
        $region25: #{tpu_custom_call.1} parent=11 // pred_check
          %p188 = pneg %p136
        $region26: #{tpu_custom_call.1} parent=11 // pred_check_branch
          %190 = sbr.rel (%p188) target = $region28
        $region27: #{tpu_custom_call.1} parent=11 // pred_region
          _
        $region28: #{tpu_custom_call.1} parent=11 // pred_fallthru
          _
      $region12: #{tpu_custom_call.1} parent=5 // pred_fallthru
        _
      %p191 = scmp.lt.s32.totalorder %s14, 4
      // Predicated region
      $region29: #{tpu_custom_call.1} parent=5 // pred_check
        %p192 = pneg %p191
      $region30: #{tpu_custom_call.1} parent=5 // pred_check_branch
        %194 = sbr.rel (%p192) target = $region32
      $region31: #{tpu_custom_call.1} parent=5 // pred_region
        // Predicated region
        $region33: #{tpu_custom_call.1} parent=31 // pred_check
          %p195 = pneg %p46
        $region34: #{tpu_custom_call.1} parent=31 // pred_check_branch
          %197 = sbr.rel (%p195) target = $region36
        $region35: #{tpu_custom_call.1} parent=31 // pred_region
          %p198 = scmp.lt.s32.totalorder %s21, 1
          %s199 = scalar_select %p198, %s21, 1
          %s200 = smul.addr %s199, 5
          %s201 = smul.addr %s200, 4
          %s202 = scalar_lea.vmem %s0, %s201
        $region36: #{tpu_custom_call.1} parent=31 // pred_fallthru
          _
      $region32: #{tpu_custom_call.1} parent=5 // pred_fallthru
        _
      %p203 = scmp.le.s32.totalorder 1, %s14
      %p204 = scmp.lt.s32.totalorder %s14, 5
      %p205 = pnand %p203, %p204
      %p206 = pneg %p205
      // Predicated region
      $region37: #{tpu_custom_call.1} parent=5 // pred_check
        _
      $region38: #{tpu_custom_call.1} parent=5 // pred_check_branch
        %208 = sbr.rel (%p205) target = $region40
      $region39: #{tpu_custom_call.1} parent=5 // pred_region
        %s209 = ssub.s32 %s14, 1
        %p210 = scmp.lt.s32.totalorder %s23, 1
        %s211 = scalar_select %p210, %s23, 1
        %s212 = smul.addr %s211, 5
        %s213 = smul.addr %s212, 4
        %s214 = scalar_lea.vmem %s0, %s213
        %p215 = pneg %p52
        %p216 = pneg %p49
        %p217 = pneg %p73
        %p218 = pneg %p70
        %p219 = pneg %p94
        %p220 = pneg %p91
        %p221 = pneg %p115
        %p222 = pneg %p112
        %p223 = pneg %p136
        %p224 = pneg %p133
        %p225 = pneg %p164
        %p226 = pneg %p161
        %s227 = sand.u32 %s151, 1
        %s228 = scalar_lea.sflag [#allocation3], %s227
        %s229 = sand.u32 %s151, 1
        %s230 = smul.addr %s229, 8
        %s231 = scalar_lea.vmem [#allocation2], %s230
        %p232 = scmp.lt.s32.totalorder %s23, 1
        %s233 = scalar_select %p232, %s23, 1
        %s234 = smul.addr %s233, 5
        %s235 = smul.addr %s234, 4
        %s236 = scalar_lea.vmem %s0, %s235
        %s237 = smul.u32 2, %s24
        %s239 = smul.u32 %s24, 256
        %s240 = sshra.s32 %s239, 7
        %s241 = sand.u32 %s239, 127
        %s242 = smul.addr %s240, 4
        %s243 = scalar_lea.vmem %s236, %s242
        %v244 = vld [vmem:[%s243] sm:$0xff]
        %v245 = vld [vmem:[%s243 + $0x8] sm:$0xf]
        %v246 = vld [vmem:[%s1] sm:$0xf]
        %249 = vst [vmem:[#allocation1] ss:$2 sm:$0xff] %v244
        %s250 = scalar_lea.vmem [#allocation1], 16
        %251 = vst [vmem:[%s250] ss:$2 sm:$0xff] %v245
        %v252 = vld.sshfl [vmem:[#allocation1] sm:$0xff pattern:$0x75316420]
        %v253 = vld.sshfl [vmem:[#allocation1 + $0x8] sm:$0xff pattern:$0x75316420]
        %v254 = vld.sshfl [vmem:[#allocation1 + $0x10] sm:$0xff pattern:$0x75316420]
        %v258 = vpack.c.bf16 %v252, %v252
        %v259 = vpack.c.bf16 %v253, %v253
        %v260 = vpack.c.bf16 %v254, %v254
        %vm261 = vcmask 31744
        %v263 = vsel %vm261, %v246, 0
        %vm265 = vcmask 1041408
        %v267 = vsel %vm265, %v258, 0
        %v270 = vsel %vm265, %v259, 0
        %v273 = vsel %vm265, %v260, 0
        %275 = vmatpush.bf16.msra.mxu0 0
        %276 = vmatpush.bf16.msra.mxu0 0
        %277 = vmatpush.bf16.msra.mxu0 0
        %278 = vmatpush.bf16.msra.mxu0 0
        %279 = vmatpush.bf16.msra.mxu0 0
        %280 = vmatpush.bf16.msra.mxu0 0
        %281 = vmatpush.bf16.msra.mxu0 0
        %282 = vmatpush.bf16.msra.mxu0 %v267
        %283 = vmatmul.bf16.gmra.mxu0 %v263
        %v284 = vpop.f32.mrf.mxu0
        %v285 = vadd.f32 0.0, %v284
        %v286 = vpop.f32.mrf.mxu0
        %287 = vdwg.mxu0
        %288 = vmatpush.bf16.msra.mxu0 0
        %289 = vmatpush.bf16.msra.mxu0 0
        %290 = vmatpush.bf16.msra.mxu0 0
        %291 = vmatpush.bf16.msra.mxu0 0
        %292 = vmatpush.bf16.msra.mxu0 0
        %293 = vmatpush.bf16.msra.mxu0 0
        %294 = vmatpush.bf16.msra.mxu0 0
        %295 = vmatpush.bf16.msra.mxu0 %v270
        %296 = vmatmul.bf16.gmra.mxu0 %v263
        %v297 = vpop.f32.mrf.mxu0
        %v298 = vadd.f32 0.0, %v297
        %v299 = vpop.f32.mrf.mxu0
        %300 = vdwg.mxu0
        %301 = vmatpush.bf16.msra.mxu0 0
        %302 = vmatpush.bf16.msra.mxu0 0
        %303 = vmatpush.bf16.msra.mxu0 0
        %304 = vmatpush.bf16.msra.mxu0 0
        %305 = vmatpush.bf16.msra.mxu0 0
        %306 = vmatpush.bf16.msra.mxu0 0
        %307 = vmatpush.bf16.msra.mxu0 0
        %308 = vmatpush.bf16.msra.mxu0 %v273
        %309 = vmatmul.bf16.gmra.mxu0 %v263
        %v310 = vpop.f32.mrf.mxu0
        %v311 = vadd.f32 0.0, %v310
        %v312 = vpop.f32.mrf.mxu0
        %313 = vdwg.mxu0
        %vm314 = vcmp.gt.f32.partialorder %v285, 0.0
        %vm315 = vcmp.gt.f32.partialorder %v298, 0.0
        %vm316 = vcmp.gt.f32.partialorder %v311, 0.0
        %v317 = vmul.f32 %v285, 0.2
        %v318 = vmul.f32 %v298, 0.2
        %v319 = vmul.f32 %v311, 0.2
        %v320 = vsel %vm314, %v285, %v317
        %v321 = vsel %vm315, %v298, %v318
        %v322 = vsel %vm316, %v311, %v319
        %323 = vrot.lane.b32.xlu0 %v320, 9
        %v324 = vpop.permute.xlu0 %323
        %325 = vrot.lane.b32.xlu0 %v321, 9
        %v326 = vpop.permute.xlu0 %325
        %327 = vrot.lane.b32.xlu0 %v322, 9
        %v328 = vpop.permute.xlu0 %327
        %v329 = vlaneseq
        %v330 = vand.u32 %v329, 127
        %vm331 = vcmp.lt.s32.totalorder %v330, 9
        %v332 = vsel %vm331, %v326, %v328
        %v333 = vsel %vm331, %v324, %v326
        %v334 = vsel %vm331, %v328, %v324
        %v335 = vld [vmem:[%s4] ss:$8 sm:$0x7]
        %v337 = vperm.slane %v335, 0
        %v338 = vperm.slane %v335, 1
        %v339 = vperm.slane %v335, 2
        %v343 = vmul.f32 %v334, %v337
        %v344 = vmul.f32 %v333, %v338
        %v345 = vmul.f32 %v332, %v339
        %v346 = vpack.c.bf16 %v344, %v343
        %v347 = vpack.c.bf16 %v345, %v345
        %v348 = vld [vmem:[%s2] sm:$0xf]
        %s349 = scalar_lea.vmem %s2, 36
        %v350 = vld [vmem:[%s349] sm:$0xf]
        %v353 = vunpack.c.l.b16 %v346
        %v354 = vunpack.c.h.b16 %v346
        %v355 = vunpack.c.l.b16 %v347
        %v356 = vpack.c.b16 %v353, %v353
        %v357 = vpack.c.b16 %v354, %v354
        %v358 = vpack.c.b16 %v355, %v355
        %359 = vrot.lane.b32.xlu0 %v356, 64
        %v360 = vpop.permute.xlu0 %359
        %361 = vrot.lane.b32.xlu0 %v357, 64
        %v362 = vpop.permute.xlu0 %361
        %363 = vrot.lane.b32.xlu0 %v358, 64
        %v364 = vpop.permute.xlu0 %363
        %vm365 = vcmask 523264
        %v366 = vsel %vm365, %v360, %v362
        %v367 = vsel %vm365, %v362, %v364
        %vm368 = vcmask 64512
        %v370 = vsel %vm368, %v350, 0
        %vm372 = vcmask 1043456
        %v374 = vsel %vm372, %v366, 0
        %v377 = vsel %vm372, %v367, 0
        %379 = vmatpush.bf16.msra.mxu0 0
        %380 = vmatpush.bf16.msra.mxu0 0
        %381 = vmatpush.bf16.msra.mxu0 0
        %382 = vmatpush.bf16.msra.mxu0 0
        %383 = vmatpush.bf16.msra.mxu0 0
        %384 = vmatpush.bf16.msra.mxu0 0
        %385 = vmatpush.bf16.msra.mxu0 0
        %386 = vmatpush.bf16.msra.mxu0 %v374
        %387 = vmatmul.bf16.gmra.mxu0 %v370
        %v388 = vpop.f32.mrf.mxu0
        %v389 = vadd.f32 0.0, %v388
        %v390 = vpop.f32.mrf.mxu0
        %391 = vdwg.mxu0
        %392 = vmatpush.bf16.msra.mxu0 0
        %393 = vmatpush.bf16.msra.mxu0 0
        %394 = vmatpush.bf16.msra.mxu0 0
        %395 = vmatpush.bf16.msra.mxu0 0
        %396 = vmatpush.bf16.msra.mxu0 0
        %397 = vmatpush.bf16.msra.mxu0 0
        %398 = vmatpush.bf16.msra.mxu0 0
        %399 = vmatpush.bf16.msra.mxu0 %v377
        %400 = vmatmul.bf16.gmra.mxu0 %v370
        %v401 = vpop.f32.mrf.mxu0
        %v402 = vadd.f32 0.0, %v401
        %v403 = vpop.f32.mrf.mxu0
        %404 = vdwg.mxu0
        %v406 = vsel %vm368, %v348, 0
        %v409 = vsel %vm372, %v356, 0
        %v412 = vsel %vm372, %v357, 0
        %414 = vmatpush.bf16.msra.mxu0 0
        %415 = vmatpush.bf16.msra.mxu0 0
        %416 = vmatpush.bf16.msra.mxu0 0
        %417 = vmatpush.bf16.msra.mxu0 0
        %418 = vmatpush.bf16.msra.mxu0 0
        %419 = vmatpush.bf16.msra.mxu0 0
        %420 = vmatpush.bf16.msra.mxu0 0
        %421 = vmatpush.bf16.msra.mxu0 %v409
        %422 = vmatmul.bf16.gmra.mxu0 %v406
        %v423 = vpop.f32.mrf.mxu0
        %v424 = vadd.f32 %v389, %v423
        %v425 = vpop.f32.mrf.mxu0
        %426 = vdwg.mxu0
        %427 = vmatpush.bf16.msra.mxu0 0
        %428 = vmatpush.bf16.msra.mxu0 0
        %429 = vmatpush.bf16.msra.mxu0 0
        %430 = vmatpush.bf16.msra.mxu0 0
        %431 = vmatpush.bf16.msra.mxu0 0
        %432 = vmatpush.bf16.msra.mxu0 0
        %433 = vmatpush.bf16.msra.mxu0 0
        %434 = vmatpush.bf16.msra.mxu0 %v412
        %435 = vmatmul.bf16.gmra.mxu0 %v406
        %v436 = vpop.f32.mrf.mxu0
        %v437 = vadd.f32 %v402, %v436
        %v438 = vpop.f32.mrf.mxu0
        %439 = vdwg.mxu0
        %s440 = scalar_lea.vmem %s2, 72
        %v441 = vld [vmem:[%s440] sm:$0xf]
        %v443 = vsel %vm368, %v441, 0
        %v446 = vsel %vm372, %v358, 0
        %448 = vmatpush.bf16.msra.mxu0 0
        %449 = vmatpush.bf16.msra.mxu0 0
        %450 = vmatpush.bf16.msra.mxu0 0
        %451 = vmatpush.bf16.msra.mxu0 0
        %452 = vmatpush.bf16.msra.mxu0 0
        %453 = vmatpush.bf16.msra.mxu0 0
        %454 = vmatpush.bf16.msra.mxu0 0
        %455 = vmatpush.bf16.msra.mxu0 %v412
        %456 = vmatmul.bf16.gmra.mxu0 %v443
        %v457 = vpop.f32.mrf.mxu0
        %v458 = vadd.f32 0.0, %v457
        %v459 = vpop.f32.mrf.mxu0
        %460 = vdwg.mxu0
        %461 = vmatpush.bf16.msra.mxu0 0
        %462 = vmatpush.bf16.msra.mxu0 0
        %463 = vmatpush.bf16.msra.mxu0 0
        %464 = vmatpush.bf16.msra.mxu0 0
        %465 = vmatpush.bf16.msra.mxu0 0
        %466 = vmatpush.bf16.msra.mxu0 0
        %467 = vmatpush.bf16.msra.mxu0 0
        %468 = vmatpush.bf16.msra.mxu0 %v446
        %469 = vmatmul.bf16.gmra.mxu0 %v443
        %v470 = vpop.f32.mrf.mxu0
        %v471 = vadd.f32 0.0, %v470
        %v472 = vpop.f32.mrf.mxu0
        %473 = vdwg.mxu0
        %v474 = vadd.f32 %v424, %v458
        %v475 = vadd.f32 %v437, %v471
        %476 = vrot.lane.b32.xlu0 %v320, 8
        %v477 = vpop.permute.xlu0 %476
        %478 = vrot.lane.b32.xlu0 %v321, 8
        %v479 = vpop.permute.xlu0 %478
        %480 = vrot.lane.b32.xlu0 %v322, 8
        %v481 = vpop.permute.xlu0 %480
        %vm482 = vcmp.lt.s32.totalorder %v330, 8
        %v483 = vsel %vm482, %v479, %v481
        %v484 = vsel %vm482, %v477, %v479
        %v485 = vsel %vm482, %v481, %v477
        %s486 = scalar_lea.vmem %s4, 1
        %v487 = vld [vmem:[%s486] ss:$8 sm:$0x7]
        %v489 = vperm.slane %v487, 0
        %v490 = vperm.slane %v487, 1
        %v491 = vperm.slane %v487, 2
        %v495 = vmul.f32 %v485, %v489
        %v496 = vmul.f32 %v484, %v490
        %v497 = vmul.f32 %v483, %v491
        %v498 = vpack.c.bf16 %v496, %v495
        %v499 = vpack.c.bf16 %v497, %v497
        %s500 = scalar_lea.vmem %s2, 4
        %v501 = vld [vmem:[%s500] sm:$0xf]
        %v503 = vunpack.c.l.b16 %v498
        %v504 = vunpack.c.h.b16 %v498
        %v505 = vpack.c.b16 %v503, %v503
        %v506 = vpack.c.b16 %v504, %v504
        %v508 = vsel %vm368, %v501, 0
        %v511 = vsel %vm372, %v505, 0
        %v514 = vsel %vm372, %v506, 0
        %516 = vmatpush.bf16.msra.mxu0 0
        %517 = vmatpush.bf16.msra.mxu0 0
        %518 = vmatpush.bf16.msra.mxu0 0
        %519 = vmatpush.bf16.msra.mxu0 0
        %520 = vmatpush.bf16.msra.mxu0 0
        %521 = vmatpush.bf16.msra.mxu0 0
        %522 = vmatpush.bf16.msra.mxu0 0
        %523 = vmatpush.bf16.msra.mxu0 %v511
        %524 = vmatmul.bf16.gmra.mxu0 %v508
        %v525 = vpop.f32.mrf.mxu0
        %v526 = vadd.f32 0.0, %v525
        %v527 = vpop.f32.mrf.mxu0
        %528 = vdwg.mxu0
        %529 = vmatpush.bf16.msra.mxu0 0
        %530 = vmatpush.bf16.msra.mxu0 0
        %531 = vmatpush.bf16.msra.mxu0 0
        %532 = vmatpush.bf16.msra.mxu0 0
        %533 = vmatpush.bf16.msra.mxu0 0
        %534 = vmatpush.bf16.msra.mxu0 0
        %535 = vmatpush.bf16.msra.mxu0 0
        %536 = vmatpush.bf16.msra.mxu0 %v514
        %537 = vmatmul.bf16.gmra.mxu0 %v508
        %v538 = vpop.f32.mrf.mxu0
        %v539 = vadd.f32 0.0, %v538
        %v540 = vpop.f32.mrf.mxu0
        %541 = vdwg.mxu0
        %v542 = vadd.f32 %v474, %v526
        %v543 = vadd.f32 %v475, %v539
        %s544 = scalar_lea.vmem %s2, 40
        %v545 = vld [vmem:[%s544] sm:$0xf]
        %v547 = vunpack.c.l.b16 %v499
        %v548 = vpack.c.b16 %v547, %v547
        %549 = vrot.lane.b32.xlu0 %v505, 64
        %v550 = vpop.permute.xlu0 %549
        %551 = vrot.lane.b32.xlu0 %v506, 64
        %v552 = vpop.permute.xlu0 %551
        %553 = vrot.lane.b32.xlu0 %v548, 64
        %v554 = vpop.permute.xlu0 %553
        %v555 = vsel %vm365, %v550, %v552
        %v556 = vsel %vm365, %v552, %v554
        %v558 = vsel %vm368, %v545, 0
        %v561 = vsel %vm372, %v555, 0
        %v564 = vsel %vm372, %v556, 0
        %566 = vmatpush.bf16.msra.mxu0 0
        %567 = vmatpush.bf16.msra.mxu0 0
        %568 = vmatpush.bf16.msra.mxu0 0
        %569 = vmatpush.bf16.msra.mxu0 0
        %570 = vmatpush.bf16.msra.mxu0 0
        %571 = vmatpush.bf16.msra.mxu0 0
        %572 = vmatpush.bf16.msra.mxu0 0
        %573 = vmatpush.bf16.msra.mxu0 %v561
        %574 = vmatmul.bf16.gmra.mxu0 %v558
        %v575 = vpop.f32.mrf.mxu0
        %v576 = vadd.f32 0.0, %v575
        %v577 = vpop.f32.mrf.mxu0
        %578 = vdwg.mxu0
        %579 = vmatpush.bf16.msra.mxu0 0
        %580 = vmatpush.bf16.msra.mxu0 0
        %581 = vmatpush.bf16.msra.mxu0 0
        %582 = vmatpush.bf16.msra.mxu0 0
        %583 = vmatpush.bf16.msra.mxu0 0
        %584 = vmatpush.bf16.msra.mxu0 0
        %585 = vmatpush.bf16.msra.mxu0 0
        %586 = vmatpush.bf16.msra.mxu0 %v564
        %587 = vmatmul.bf16.gmra.mxu0 %v558
        %v588 = vpop.f32.mrf.mxu0
        %v589 = vadd.f32 0.0, %v588
        %v590 = vpop.f32.mrf.mxu0
        %591 = vdwg.mxu0
        %v592 = vadd.f32 %v542, %v576
        %v593 = vadd.f32 %v543, %v589
        %s594 = scalar_lea.vmem %s2, 76
        %v595 = vld [vmem:[%s594] sm:$0xf]
        %v597 = vsel %vm368, %v595, 0
        %v600 = vsel %vm372, %v548, 0
        %602 = vmatpush.bf16.msra.mxu0 0
        %603 = vmatpush.bf16.msra.mxu0 0
        %604 = vmatpush.bf16.msra.mxu0 0
        %605 = vmatpush.bf16.msra.mxu0 0
        %606 = vmatpush.bf16.msra.mxu0 0
        %607 = vmatpush.bf16.msra.mxu0 0
        %608 = vmatpush.bf16.msra.mxu0 0
        %609 = vmatpush.bf16.msra.mxu0 %v514
        %610 = vmatmul.bf16.gmra.mxu0 %v597
        %v611 = vpop.f32.mrf.mxu0
        %v612 = vadd.f32 0.0, %v611
        %v613 = vpop.f32.mrf.mxu0
        %614 = vdwg.mxu0
        %615 = vmatpush.bf16.msra.mxu0 0
        %616 = vmatpush.bf16.msra.mxu0 0
        %617 = vmatpush.bf16.msra.mxu0 0
        %618 = vmatpush.bf16.msra.mxu0 0
        %619 = vmatpush.bf16.msra.mxu0 0
        %620 = vmatpush.bf16.msra.mxu0 0
        %621 = vmatpush.bf16.msra.mxu0 0
        %622 = vmatpush.bf16.msra.mxu0 %v600
        %623 = vmatmul.bf16.gmra.mxu0 %v597
        %v624 = vpop.f32.mrf.mxu0
        %v625 = vadd.f32 0.0, %v624
        %v626 = vpop.f32.mrf.mxu0
        %627 = vdwg.mxu0
        %v628 = vadd.f32 %v592, %v612
        %v629 = vadd.f32 %v593, %v625
        %630 = vrot.lane.b32.xlu0 %v320, 7
        %v631 = vpop.permute.xlu0 %630
        %632 = vrot.lane.b32.xlu0 %v321, 7
        %v633 = vpop.permute.xlu0 %632
        %634 = vrot.lane.b32.xlu0 %v322, 7
        %v635 = vpop.permute.xlu0 %634
        %vm636 = vcmp.lt.s32.totalorder %v330, 7
        %v637 = vsel %vm636, %v633, %v635
        %v638 = vsel %vm636, %v631, %v633
        %v639 = vsel %vm636, %v635, %v631
        %s640 = scalar_lea.vmem %s4, 2
        %v641 = vld [vmem:[%s640] ss:$8 sm:$0x7]
        %v643 = vperm.slane %v641, 0
        %v644 = vperm.slane %v641, 1
        %v645 = vperm.slane %v641, 2
        %v649 = vmul.f32 %v639, %v643
        %v650 = vmul.f32 %v638, %v644
        %v651 = vmul.f32 %v637, %v645
        %v652 = vpack.c.bf16 %v650, %v649
        %v653 = vpack.c.bf16 %v651, %v651
        %s654 = scalar_lea.vmem %s2, 8
        %v655 = vld [vmem:[%s654] sm:$0xf]
        %v657 = vunpack.c.l.b16 %v652
        %v658 = vunpack.c.h.b16 %v652
        %v659 = vpack.c.b16 %v657, %v657
        %v660 = vpack.c.b16 %v658, %v658
        %v662 = vsel %vm368, %v655, 0
        %v665 = vsel %vm372, %v659, 0
        %v668 = vsel %vm372, %v660, 0
        %670 = vmatpush.bf16.msra.mxu0 0
        %671 = vmatpush.bf16.msra.mxu0 0
        %672 = vmatpush.bf16.msra.mxu0 0
        %673 = vmatpush.bf16.msra.mxu0 0
        %674 = vmatpush.bf16.msra.mxu0 0
        %675 = vmatpush.bf16.msra.mxu0 0
        %676 = vmatpush.bf16.msra.mxu0 0
        %677 = vmatpush.bf16.msra.mxu0 %v665
        %678 = vmatmul.bf16.gmra.mxu0 %v662
        %v679 = vpop.f32.mrf.mxu0
        %v680 = vadd.f32 0.0, %v679
        %v681 = vpop.f32.mrf.mxu0
        %682 = vdwg.mxu0
        %683 = vmatpush.bf16.msra.mxu0 0
        %684 = vmatpush.bf16.msra.mxu0 0
        %685 = vmatpush.bf16.msra.mxu0 0
        %686 = vmatpush.bf16.msra.mxu0 0
        %687 = vmatpush.bf16.msra.mxu0 0
        %688 = vmatpush.bf16.msra.mxu0 0
        %689 = vmatpush.bf16.msra.mxu0 0
        %690 = vmatpush.bf16.msra.mxu0 %v668
        %691 = vmatmul.bf16.gmra.mxu0 %v662
        %v692 = vpop.f32.mrf.mxu0
        %v693 = vadd.f32 0.0, %v692
        %v694 = vpop.f32.mrf.mxu0
        %695 = vdwg.mxu0
        %v696 = vadd.f32 %v628, %v680
        %v697 = vadd.f32 %v629, %v693
        %s698 = scalar_lea.vmem %s2, 44
        %v699 = vld [vmem:[%s698] sm:$0xf]
        %v701 = vunpack.c.l.b16 %v653
        %v702 = vpack.c.b16 %v701, %v701
        %703 = vrot.lane.b32.xlu0 %v659, 64
        %v704 = vpop.permute.xlu0 %703
        %705 = vrot.lane.b32.xlu0 %v660, 64
        %v706 = vpop.permute.xlu0 %705
        %707 = vrot.lane.b32.xlu0 %v702, 64
        %v708 = vpop.permute.xlu0 %707
        %v709 = vsel %vm365, %v704, %v706
        %v710 = vsel %vm365, %v706, %v708
        %v712 = vsel %vm368, %v699, 0
        %v715 = vsel %vm372, %v709, 0
        %v718 = vsel %vm372, %v710, 0
        %720 = vmatpush.bf16.msra.mxu0 0
        %721 = vmatpush.bf16.msra.mxu0 0
        %722 = vmatpush.bf16.msra.mxu0 0
        %723 = vmatpush.bf16.msra.mxu0 0
        %724 = vmatpush.bf16.msra.mxu0 0
        %725 = vmatpush.bf16.msra.mxu0 0
        %726 = vmatpush.bf16.msra.mxu0 0
        %727 = vmatpush.bf16.msra.mxu0 %v715
        %728 = vmatmul.bf16.gmra.mxu0 %v712
        %v729 = vpop.f32.mrf.mxu0
        %v730 = vadd.f32 0.0, %v729
        %v731 = vpop.f32.mrf.mxu0
        %732 = vdwg.mxu0
        %733 = vmatpush.bf16.msra.mxu0 0
        %734 = vmatpush.bf16.msra.mxu0 0
        %735 = vmatpush.bf16.msra.mxu0 0
        %736 = vmatpush.bf16.msra.mxu0 0
        %737 = vmatpush.bf16.msra.mxu0 0
        %738 = vmatpush.bf16.msra.mxu0 0
        %739 = vmatpush.bf16.msra.mxu0 0
        %740 = vmatpush.bf16.msra.mxu0 %v718
        %741 = vmatmul.bf16.gmra.mxu0 %v712
        %v742 = vpop.f32.mrf.mxu0
        %v743 = vadd.f32 0.0, %v742
        %v744 = vpop.f32.mrf.mxu0
        %745 = vdwg.mxu0
        %v746 = vadd.f32 %v696, %v730
        %v747 = vadd.f32 %v697, %v743
        %s748 = scalar_lea.vmem %s2, 80
        %v749 = vld [vmem:[%s748] sm:$0xf]
        %v751 = vsel %vm368, %v749, 0
        %v754 = vsel %vm372, %v702, 0
        %756 = vmatpush.bf16.msra.mxu0 0
        %757 = vmatpush.bf16.msra.mxu0 0
        %758 = vmatpush.bf16.msra.mxu0 0
        %759 = vmatpush.bf16.msra.mxu0 0
        %760 = vmatpush.bf16.msra.mxu0 0
        %761 = vmatpush.bf16.msra.mxu0 0
        %762 = vmatpush.bf16.msra.mxu0 0
        %763 = vmatpush.bf16.msra.mxu0 %v668
        %764 = vmatmul.bf16.gmra.mxu0 %v751
        %v765 = vpop.f32.mrf.mxu0
        %v766 = vadd.f32 0.0, %v765
        %v767 = vpop.f32.mrf.mxu0
        %768 = vdwg.mxu0
        %769 = vmatpush.bf16.msra.mxu0 0
        %770 = vmatpush.bf16.msra.mxu0 0
        %771 = vmatpush.bf16.msra.mxu0 0
        %772 = vmatpush.bf16.msra.mxu0 0
        %773 = vmatpush.bf16.msra.mxu0 0
        %774 = vmatpush.bf16.msra.mxu0 0
        %775 = vmatpush.bf16.msra.mxu0 0
        %776 = vmatpush.bf16.msra.mxu0 %v754
        %777 = vmatmul.bf16.gmra.mxu0 %v751
        %v778 = vpop.f32.mrf.mxu0
        %v779 = vadd.f32 0.0, %v778
        %v780 = vpop.f32.mrf.mxu0
        %781 = vdwg.mxu0
        %v782 = vadd.f32 %v746, %v766
        %v783 = vadd.f32 %v747, %v779
        %784 = vrot.lane.b32.xlu0 %v320, 1
        %v785 = vpop.permute.xlu0 %784
        %786 = vrot.lane.b32.xlu0 %v321, 1
        %v787 = vpop.permute.xlu0 %786
        %788 = vrot.lane.b32.xlu0 %v322, 1
        %v789 = vpop.permute.xlu0 %788
        %vm790 = vcmp.lt.s32.totalorder %v330, 1
        %v791 = vsel %vm790, %v787, %v789
        %v792 = vsel %vm790, %v785, %v787
        %v793 = vsel %vm790, %v789, %v785
        %s794 = scalar_lea.vmem %s4, 3
        %v795 = vld [vmem:[%s794] ss:$8 sm:$0x7]
        %v797 = vperm.slane %v795, 0
        %v798 = vperm.slane %v795, 1
        %v799 = vperm.slane %v795, 2
        %v803 = vmul.f32 %v793, %v797
        %v804 = vmul.f32 %v792, %v798
        %v805 = vmul.f32 %v791, %v799
        %v806 = vpack.c.bf16 %v804, %v803
        %v807 = vpack.c.bf16 %v805, %v805
        %s808 = scalar_lea.vmem %s2, 12
        %v809 = vld [vmem:[%s808] sm:$0xf]
        %v811 = vunpack.c.l.b16 %v806
        %v812 = vunpack.c.h.b16 %v806
        %v813 = vpack.c.b16 %v811, %v811
        %v814 = vpack.c.b16 %v812, %v812
        %v816 = vsel %vm368, %v809, 0
        %v819 = vsel %vm372, %v813, 0
        %v822 = vsel %vm372, %v814, 0
        %824 = vmatpush.bf16.msra.mxu0 0
        %825 = vmatpush.bf16.msra.mxu0 0
        %826 = vmatpush.bf16.msra.mxu0 0
        %827 = vmatpush.bf16.msra.mxu0 0
        %828 = vmatpush.bf16.msra.mxu0 0
        %829 = vmatpush.bf16.msra.mxu0 0
        %830 = vmatpush.bf16.msra.mxu0 0
        %831 = vmatpush.bf16.msra.mxu0 %v819
        %832 = vmatmul.bf16.gmra.mxu0 %v816
        %v833 = vpop.f32.mrf.mxu0
        %v834 = vadd.f32 0.0, %v833
        %v835 = vpop.f32.mrf.mxu0
        %836 = vdwg.mxu0
        %837 = vmatpush.bf16.msra.mxu0 0
        %838 = vmatpush.bf16.msra.mxu0 0
        %839 = vmatpush.bf16.msra.mxu0 0
        %840 = vmatpush.bf16.msra.mxu0 0
        %841 = vmatpush.bf16.msra.mxu0 0
        %842 = vmatpush.bf16.msra.mxu0 0
        %843 = vmatpush.bf16.msra.mxu0 0
        %844 = vmatpush.bf16.msra.mxu0 %v822
        %845 = vmatmul.bf16.gmra.mxu0 %v816
        %v846 = vpop.f32.mrf.mxu0
        %v847 = vadd.f32 0.0, %v846
        %v848 = vpop.f32.mrf.mxu0
        %849 = vdwg.mxu0
        %v850 = vadd.f32 %v782, %v834
        %v851 = vadd.f32 %v783, %v847
        %s852 = scalar_lea.vmem %s2, 48
        %v853 = vld [vmem:[%s852] sm:$0xf]
        %v855 = vunpack.c.l.b16 %v807
        %v856 = vpack.c.b16 %v855, %v855
        %857 = vrot.lane.b32.xlu0 %v813, 64
        %v858 = vpop.permute.xlu0 %857
        %859 = vrot.lane.b32.xlu0 %v814, 64
        %v860 = vpop.permute.xlu0 %859
        %861 = vrot.lane.b32.xlu0 %v856, 64
        %v862 = vpop.permute.xlu0 %861
        %v863 = vsel %vm365, %v858, %v860
        %v864 = vsel %vm365, %v860, %v862
        %v866 = vsel %vm368, %v853, 0
        %v869 = vsel %vm372, %v863, 0
        %v872 = vsel %vm372, %v864, 0
        %874 = vmatpush.bf16.msra.mxu0 0
        %875 = vmatpush.bf16.msra.mxu0 0
        %876 = vmatpush.bf16.msra.mxu0 0
        %877 = vmatpush.bf16.msra.mxu0 0
        %878 = vmatpush.bf16.msra.mxu0 0
        %879 = vmatpush.bf16.msra.mxu0 0
        %880 = vmatpush.bf16.msra.mxu0 0
        %881 = vmatpush.bf16.msra.mxu0 %v869
        %882 = vmatmul.bf16.gmra.mxu0 %v866
        %v883 = vpop.f32.mrf.mxu0
        %v884 = vadd.f32 0.0, %v883
        %v885 = vpop.f32.mrf.mxu0
        %886 = vdwg.mxu0
        %887 = vmatpush.bf16.msra.mxu0 0
        %888 = vmatpush.bf16.msra.mxu0 0
        %889 = vmatpush.bf16.msra.mxu0 0
        %890 = vmatpush.bf16.msra.mxu0 0
        %891 = vmatpush.bf16.msra.mxu0 0
        %892 = vmatpush.bf16.msra.mxu0 0
        %893 = vmatpush.bf16.msra.mxu0 0
        %894 = vmatpush.bf16.msra.mxu0 %v872
        %895 = vmatmul.bf16.gmra.mxu0 %v866
        %v896 = vpop.f32.mrf.mxu0
        %v897 = vadd.f32 0.0, %v896
        %v898 = vpop.f32.mrf.mxu0
        %899 = vdwg.mxu0
        %v900 = vadd.f32 %v850, %v884
        %v901 = vadd.f32 %v851, %v897
        %s902 = scalar_lea.vmem %s2, 84
        %v903 = vld [vmem:[%s902] sm:$0xf]
        %v905 = vsel %vm368, %v903, 0
        %v908 = vsel %vm372, %v856, 0
        %910 = vmatpush.bf16.msra.mxu0 0
        %911 = vmatpush.bf16.msra.mxu0 0
        %912 = vmatpush.bf16.msra.mxu0 0
        %913 = vmatpush.bf16.msra.mxu0 0
        %914 = vmatpush.bf16.msra.mxu0 0
        %915 = vmatpush.bf16.msra.mxu0 0
        %916 = vmatpush.bf16.msra.mxu0 0
        %917 = vmatpush.bf16.msra.mxu0 %v822
        %918 = vmatmul.bf16.gmra.mxu0 %v905
        %v919 = vpop.f32.mrf.mxu0
        %v920 = vadd.f32 0.0, %v919
        %v921 = vpop.f32.mrf.mxu0
        %922 = vdwg.mxu0
        %923 = vmatpush.bf16.msra.mxu0 0
        %924 = vmatpush.bf16.msra.mxu0 0
        %925 = vmatpush.bf16.msra.mxu0 0
        %926 = vmatpush.bf16.msra.mxu0 0
        %927 = vmatpush.bf16.msra.mxu0 0
        %928 = vmatpush.bf16.msra.mxu0 0
        %929 = vmatpush.bf16.msra.mxu0 0
        %930 = vmatpush.bf16.msra.mxu0 %v908
        %931 = vmatmul.bf16.gmra.mxu0 %v905
        %v932 = vpop.f32.mrf.mxu0
        %v933 = vadd.f32 0.0, %v932
        %v934 = vpop.f32.mrf.mxu0
        %935 = vdwg.mxu0
        %v936 = vadd.f32 %v900, %v920
        %v937 = vadd.f32 %v901, %v933
        %v938 = vpack.c.bf16 %v321, %v320
        %v939 = vpack.c.bf16 %v322, %v322
        %s940 = scalar_lea.vmem %s2, 16
        %v941 = vld [vmem:[%s940] sm:$0xf]
        %v943 = vunpack.c.l.b16 %v938
        %v944 = vunpack.c.h.b16 %v938
        %v945 = vpack.c.b16 %v943, %v943
        %v946 = vpack.c.b16 %v944, %v944
        %v948 = vsel %vm368, %v941, 0
        %v951 = vsel %vm372, %v945, 0
        %v954 = vsel %vm372, %v946, 0
        %956 = vmatpush.bf16.msra.mxu0 0
        %957 = vmatpush.bf16.msra.mxu0 0
        %958 = vmatpush.bf16.msra.mxu0 0
        %959 = vmatpush.bf16.msra.mxu0 0
        %960 = vmatpush.bf16.msra.mxu0 0
        %961 = vmatpush.bf16.msra.mxu0 0
        %962 = vmatpush.bf16.msra.mxu0 0
        %963 = vmatpush.bf16.msra.mxu0 %v951
        %964 = vmatmul.bf16.gmra.mxu0 %v948
        %v965 = vpop.f32.mrf.mxu0
        %v966 = vadd.f32 0.0, %v965
        %v967 = vpop.f32.mrf.mxu0
        %968 = vdwg.mxu0
        %969 = vmatpush.bf16.msra.mxu0 0
        %970 = vmatpush.bf16.msra.mxu0 0
        %971 = vmatpush.bf16.msra.mxu0 0
        %972 = vmatpush.bf16.msra.mxu0 0
        %973 = vmatpush.bf16.msra.mxu0 0
        %974 = vmatpush.bf16.msra.mxu0 0
        %975 = vmatpush.bf16.msra.mxu0 0
        %976 = vmatpush.bf16.msra.mxu0 %v954
        %977 = vmatmul.bf16.gmra.mxu0 %v948
        %v978 = vpop.f32.mrf.mxu0
        %v979 = vadd.f32 0.0, %v978
        %v980 = vpop.f32.mrf.mxu0
        %981 = vdwg.mxu0
        %v982 = vadd.f32 %v936, %v966
        %v983 = vadd.f32 %v937, %v979
        %s984 = scalar_lea.vmem %s2, 52
        %v985 = vld [vmem:[%s984] sm:$0xf]
        %v987 = vunpack.c.l.b16 %v939
        %v988 = vpack.c.b16 %v987, %v987
        %989 = vrot.lane.b32.xlu0 %v945, 64
        %v990 = vpop.permute.xlu0 %989
        %991 = vrot.lane.b32.xlu0 %v946, 64
        %v992 = vpop.permute.xlu0 %991
        %993 = vrot.lane.b32.xlu0 %v988, 64
        %v994 = vpop.permute.xlu0 %993
        %v995 = vsel %vm365, %v990, %v992
        %v996 = vsel %vm365, %v992, %v994
        %v998 = vsel %vm368, %v985, 0
        %v1001 = vsel %vm372, %v995, 0
        %v1004 = vsel %vm372, %v996, 0
        %1006 = vmatpush.bf16.msra.mxu0 0
        %1007 = vmatpush.bf16.msra.mxu0 0
        %1008 = vmatpush.bf16.msra.mxu0 0
        %1009 = vmatpush.bf16.msra.mxu0 0
        %1010 = vmatpush.bf16.msra.mxu0 0
        %1011 = vmatpush.bf16.msra.mxu0 0
        %1012 = vmatpush.bf16.msra.mxu0 0
        %1013 = vmatpush.bf16.msra.mxu0 %v1001
        %1014 = vmatmul.bf16.gmra.mxu0 %v998
        %v1015 = vpop.f32.mrf.mxu0
        %v1016 = vadd.f32 0.0, %v1015
        %v1017 = vpop.f32.mrf.mxu0
        %1018 = vdwg.mxu0
        %1019 = vmatpush.bf16.msra.mxu0 0
        %1020 = vmatpush.bf16.msra.mxu0 0
        %1021 = vmatpush.bf16.msra.mxu0 0
        %1022 = vmatpush.bf16.msra.mxu0 0
        %1023 = vmatpush.bf16.msra.mxu0 0
        %1024 = vmatpush.bf16.msra.mxu0 0
        %1025 = vmatpush.bf16.msra.mxu0 0
        %1026 = vmatpush.bf16.msra.mxu0 %v1004
        %1027 = vmatmul.bf16.gmra.mxu0 %v998
        %v1028 = vpop.f32.mrf.mxu0
        %v1029 = vadd.f32 0.0, %v1028
        %v1030 = vpop.f32.mrf.mxu0
        %1031 = vdwg.mxu0
        %v1032 = vadd.f32 %v982, %v1016
        %v1033 = vadd.f32 %v983, %v1029
        %s1034 = scalar_lea.vmem %s2, 88
        %v1035 = vld [vmem:[%s1034] sm:$0xf]
        %v1037 = vsel %vm368, %v1035, 0
        %v1040 = vsel %vm372, %v988, 0
        %1042 = vmatpush.bf16.msra.mxu0 0
        %1043 = vmatpush.bf16.msra.mxu0 0
        %1044 = vmatpush.bf16.msra.mxu0 0
        %1045 = vmatpush.bf16.msra.mxu0 0
        %1046 = vmatpush.bf16.msra.mxu0 0
        %1047 = vmatpush.bf16.msra.mxu0 0
        %1048 = vmatpush.bf16.msra.mxu0 0
        %1049 = vmatpush.bf16.msra.mxu0 %v954
        %1050 = vmatmul.bf16.gmra.mxu0 %v1037
        %v1051 = vpop.f32.mrf.mxu0
        %v1052 = vadd.f32 0.0, %v1051
        %v1053 = vpop.f32.mrf.mxu0
        %1054 = vdwg.mxu0
        %1055 = vmatpush.bf16.msra.mxu0 0
        %1056 = vmatpush.bf16.msra.mxu0 0
        %1057 = vmatpush.bf16.msra.mxu0 0
        %1058 = vmatpush.bf16.msra.mxu0 0
        %1059 = vmatpush.bf16.msra.mxu0 0
        %1060 = vmatpush.bf16.msra.mxu0 0
        %1061 = vmatpush.bf16.msra.mxu0 0
        %1062 = vmatpush.bf16.msra.mxu0 %v1040
        %1063 = vmatmul.bf16.gmra.mxu0 %v1037
        %v1064 = vpop.f32.mrf.mxu0
        %v1065 = vadd.f32 0.0, %v1064
        %v1066 = vpop.f32.mrf.mxu0
        %1067 = vdwg.mxu0
        %v1068 = vadd.f32 %v1032, %v1052
        %v1069 = vadd.f32 %v1033, %v1065
        %1070 = vrot.lane.b32.xlu0 %v320, 127
        %v1071 = vpop.permute.xlu0 %1070
        %1072 = vrot.lane.b32.xlu0 %v321, 127
        %v1073 = vpop.permute.xlu0 %1072
        %1074 = vrot.lane.b32.xlu0 %v322, 127
        %v1075 = vpop.permute.xlu0 %1074
        %vm1076 = vcmp.lt.s32.totalorder %v330, 127
        %v1077 = vsel %vm1076, %v1073, %v1075
        %v1078 = vsel %vm1076, %v1071, %v1073
        %v1079 = vsel %vm1076, %v1075, %v1071
        %s1080 = scalar_lea.vmem %s4, 5
        %v1081 = vld [vmem:[%s1080] ss:$8 sm:$0x7]
        %v1083 = vperm.slane %v1081, 0
        %v1084 = vperm.slane %v1081, 1
        %v1085 = vperm.slane %v1081, 2
        %v1089 = vmul.f32 %v1078, %v1083
        %v1090 = vmul.f32 %v1077, %v1084
        %v1091 = vmul.f32 %v1079, %v1085
        %v1092 = vpack.c.bf16 %v1090, %v1089
        %v1093 = vpack.c.bf16 %v1091, %v1091
        %s1094 = scalar_lea.vmem %s2, 20
        %v1095 = vld [vmem:[%s1094] sm:$0xf]
        %v1097 = vunpack.c.l.b16 %v1092
        %v1098 = vunpack.c.h.b16 %v1092
        %v1099 = vpack.c.b16 %v1097, %v1097
        %v1100 = vpack.c.b16 %v1098, %v1098
        %v1102 = vsel %vm368, %v1095, 0
        %v1105 = vsel %vm372, %v1099, 0
        %v1108 = vsel %vm372, %v1100, 0
        %1110 = vmatpush.bf16.msra.mxu0 0
        %1111 = vmatpush.bf16.msra.mxu0 0
        %1112 = vmatpush.bf16.msra.mxu0 0
        %1113 = vmatpush.bf16.msra.mxu0 0
        %1114 = vmatpush.bf16.msra.mxu0 0
        %1115 = vmatpush.bf16.msra.mxu0 0
        %1116 = vmatpush.bf16.msra.mxu0 0
        %1117 = vmatpush.bf16.msra.mxu0 %v1105
        %1118 = vmatmul.bf16.gmra.mxu0 %v1102
        %v1119 = vpop.f32.mrf.mxu0
        %v1120 = vadd.f32 0.0, %v1119
        %v1121 = vpop.f32.mrf.mxu0
        %1122 = vdwg.mxu0
        %1123 = vmatpush.bf16.msra.mxu0 0
        %1124 = vmatpush.bf16.msra.mxu0 0
        %1125 = vmatpush.bf16.msra.mxu0 0
        %1126 = vmatpush.bf16.msra.mxu0 0
        %1127 = vmatpush.bf16.msra.mxu0 0
        %1128 = vmatpush.bf16.msra.mxu0 0
        %1129 = vmatpush.bf16.msra.mxu0 0
        %1130 = vmatpush.bf16.msra.mxu0 %v1108
        %1131 = vmatmul.bf16.gmra.mxu0 %v1102
        %v1132 = vpop.f32.mrf.mxu0
        %v1133 = vadd.f32 0.0, %v1132
        %v1134 = vpop.f32.mrf.mxu0
        %1135 = vdwg.mxu0
        %v1136 = vadd.f32 %v1068, %v1120
        %v1137 = vadd.f32 %v1069, %v1133
        %s1138 = scalar_lea.vmem %s2, 56
        %v1139 = vld [vmem:[%s1138] sm:$0xf]
        %v1141 = vunpack.c.l.b16 %v1093
        %v1142 = vpack.c.b16 %v1141, %v1141
        %1143 = vrot.lane.b32.xlu0 %v1099, 64
        %v1144 = vpop.permute.xlu0 %1143
        %1145 = vrot.lane.b32.xlu0 %v1100, 64
        %v1146 = vpop.permute.xlu0 %1145
        %1147 = vrot.lane.b32.xlu0 %v1142, 64
        %v1148 = vpop.permute.xlu0 %1147
        %v1149 = vsel %vm365, %v1144, %v1146
        %v1150 = vsel %vm365, %v1146, %v1148
        %v1152 = vsel %vm368, %v1139, 0
        %v1155 = vsel %vm372, %v1149, 0
        %v1158 = vsel %vm372, %v1150, 0
        %1160 = vmatpush.bf16.msra.mxu0 0
        %1161 = vmatpush.bf16.msra.mxu0 0
        %1162 = vmatpush.bf16.msra.mxu0 0
        %1163 = vmatpush.bf16.msra.mxu0 0
        %1164 = vmatpush.bf16.msra.mxu0 0
        %1165 = vmatpush.bf16.msra.mxu0 0
        %1166 = vmatpush.bf16.msra.mxu0 0
        %1167 = vmatpush.bf16.msra.mxu0 %v1155
        %1168 = vmatmul.bf16.gmra.mxu0 %v1152
        %v1169 = vpop.f32.mrf.mxu0
        %v1170 = vadd.f32 0.0, %v1169
        %v1171 = vpop.f32.mrf.mxu0
        %1172 = vdwg.mxu0
        %1173 = vmatpush.bf16.msra.mxu0 0
        %1174 = vmatpush.bf16.msra.mxu0 0
        %1175 = vmatpush.bf16.msra.mxu0 0
        %1176 = vmatpush.bf16.msra.mxu0 0
        %1177 = vmatpush.bf16.msra.mxu0 0
        %1178 = vmatpush.bf16.msra.mxu0 0
        %1179 = vmatpush.bf16.msra.mxu0 0
        %1180 = vmatpush.bf16.msra.mxu0 %v1158
        %1181 = vmatmul.bf16.gmra.mxu0 %v1152
        %v1182 = vpop.f32.mrf.mxu0
        %v1183 = vadd.f32 0.0, %v1182
        %v1184 = vpop.f32.mrf.mxu0
        %1185 = vdwg.mxu0
        %v1186 = vadd.f32 %v1136, %v1170
        %v1187 = vadd.f32 %v1137, %v1183
        %s1188 = scalar_lea.vmem %s2, 92
        %v1189 = vld [vmem:[%s1188] sm:$0xf]
        %v1191 = vsel %vm368, %v1189, 0
        %v1194 = vsel %vm372, %v1142, 0
        %1196 = vmatpush.bf16.msra.mxu0 0
        %1197 = vmatpush.bf16.msra.mxu0 0
        %1198 = vmatpush.bf16.msra.mxu0 0
        %1199 = vmatpush.bf16.msra.mxu0 0
        %1200 = vmatpush.bf16.msra.mxu0 0
        %1201 = vmatpush.bf16.msra.mxu0 0
        %1202 = vmatpush.bf16.msra.mxu0 0
        %1203 = vmatpush.bf16.msra.mxu0 %v1108
        %1204 = vmatmul.bf16.gmra.mxu0 %v1191
        %v1205 = vpop.f32.mrf.mxu0
        %v1206 = vadd.f32 0.0, %v1205
        %v1207 = vpop.f32.mrf.mxu0
        %1208 = vdwg.mxu0
        %1209 = vmatpush.bf16.msra.mxu0 0
        %1210 = vmatpush.bf16.msra.mxu0 0
        %1211 = vmatpush.bf16.msra.mxu0 0
        %1212 = vmatpush.bf16.msra.mxu0 0
        %1213 = vmatpush.bf16.msra.mxu0 0
        %1214 = vmatpush.bf16.msra.mxu0 0
        %1215 = vmatpush.bf16.msra.mxu0 0
        %1216 = vmatpush.bf16.msra.mxu0 %v1194
        %1217 = vmatmul.bf16.gmra.mxu0 %v1191
        %v1218 = vpop.f32.mrf.mxu0
        %v1219 = vadd.f32 0.0, %v1218
        %v1220 = vpop.f32.mrf.mxu0
        %1221 = vdwg.mxu0
        %v1222 = vadd.f32 %v1186, %v1206
        %v1223 = vadd.f32 %v1187, %v1219
        %1224 = vrot.lane.b32.xlu0 %v320, 121
        %v1225 = vpop.permute.xlu0 %1224
        %1226 = vrot.lane.b32.xlu0 %v321, 121
        %v1227 = vpop.permute.xlu0 %1226
        %1228 = vrot.lane.b32.xlu0 %v322, 121
        %v1229 = vpop.permute.xlu0 %1228
        %vm1230 = vcmp.lt.s32.totalorder %v330, 121
        %v1231 = vsel %vm1230, %v1227, %v1229
        %v1232 = vsel %vm1230, %v1225, %v1227
        %v1233 = vsel %vm1230, %v1229, %v1225
        %s1234 = scalar_lea.vmem %s4, 6
        %v1235 = vld [vmem:[%s1234] ss:$8 sm:$0x7]
        %v1237 = vperm.slane %v1235, 0
        %v1238 = vperm.slane %v1235, 1
        %v1239 = vperm.slane %v1235, 2
        %v1243 = vmul.f32 %v1232, %v1237
        %v1244 = vmul.f32 %v1231, %v1238
        %v1245 = vmul.f32 %v1233, %v1239
        %v1246 = vpack.c.bf16 %v1244, %v1243
        %v1247 = vpack.c.bf16 %v1245, %v1245
        %s1248 = scalar_lea.vmem %s2, 24
        %v1249 = vld [vmem:[%s1248] sm:$0xf]
        %v1251 = vunpack.c.l.b16 %v1246
        %v1252 = vunpack.c.h.b16 %v1246
        %v1253 = vpack.c.b16 %v1251, %v1251
        %v1254 = vpack.c.b16 %v1252, %v1252
        %v1256 = vsel %vm368, %v1249, 0
        %v1259 = vsel %vm372, %v1253, 0
        %v1262 = vsel %vm372, %v1254, 0
        %1264 = vmatpush.bf16.msra.mxu0 0
        %1265 = vmatpush.bf16.msra.mxu0 0
        %1266 = vmatpush.bf16.msra.mxu0 0
        %1267 = vmatpush.bf16.msra.mxu0 0
        %1268 = vmatpush.bf16.msra.mxu0 0
        %1269 = vmatpush.bf16.msra.mxu0 0
        %1270 = vmatpush.bf16.msra.mxu0 0
        %1271 = vmatpush.bf16.msra.mxu0 %v1259
        %1272 = vmatmul.bf16.gmra.mxu0 %v1256
        %v1273 = vpop.f32.mrf.mxu0
        %v1274 = vadd.f32 0.0, %v1273
        %v1275 = vpop.f32.mrf.mxu0
        %1276 = vdwg.mxu0
        %1277 = vmatpush.bf16.msra.mxu0 0
        %1278 = vmatpush.bf16.msra.mxu0 0
        %1279 = vmatpush.bf16.msra.mxu0 0
        %1280 = vmatpush.bf16.msra.mxu0 0
        %1281 = vmatpush.bf16.msra.mxu0 0
        %1282 = vmatpush.bf16.msra.mxu0 0
        %1283 = vmatpush.bf16.msra.mxu0 0
        %1284 = vmatpush.bf16.msra.mxu0 %v1262
        %1285 = vmatmul.bf16.gmra.mxu0 %v1256
        %v1286 = vpop.f32.mrf.mxu0
        %v1287 = vadd.f32 0.0, %v1286
        %v1288 = vpop.f32.mrf.mxu0
        %1289 = vdwg.mxu0
        %v1290 = vadd.f32 %v1222, %v1274
        %v1291 = vadd.f32 %v1223, %v1287
        %s1292 = scalar_lea.vmem %s2, 60
        %v1293 = vld [vmem:[%s1292] sm:$0xf]
        %v1295 = vunpack.c.l.b16 %v1247
        %v1296 = vpack.c.b16 %v1295, %v1295
        %1297 = vrot.lane.b32.xlu0 %v1253, 64
        %v1298 = vpop.permute.xlu0 %1297
        %1299 = vrot.lane.b32.xlu0 %v1254, 64
        %v1300 = vpop.permute.xlu0 %1299
        %1301 = vrot.lane.b32.xlu0 %v1296, 64
        %v1302 = vpop.permute.xlu0 %1301
        %v1303 = vsel %vm365, %v1298, %v1300
        %v1304 = vsel %vm365, %v1300, %v1302
        %v1306 = vsel %vm368, %v1293, 0
        %v1309 = vsel %vm372, %v1303, 0
        %v1312 = vsel %vm372, %v1304, 0
        %1314 = vmatpush.bf16.msra.mxu0 0
        %1315 = vmatpush.bf16.msra.mxu0 0
        %1316 = vmatpush.bf16.msra.mxu0 0
        %1317 = vmatpush.bf16.msra.mxu0 0
        %1318 = vmatpush.bf16.msra.mxu0 0
        %1319 = vmatpush.bf16.msra.mxu0 0
        %1320 = vmatpush.bf16.msra.mxu0 0
        %1321 = vmatpush.bf16.msra.mxu0 %v1309
        %1322 = vmatmul.bf16.gmra.mxu0 %v1306
        %v1323 = vpop.f32.mrf.mxu0
        %v1324 = vadd.f32 0.0, %v1323
        %v1325 = vpop.f32.mrf.mxu0
        %1326 = vdwg.mxu0
        %1327 = vmatpush.bf16.msra.mxu0 0
        %1328 = vmatpush.bf16.msra.mxu0 0
        %1329 = vmatpush.bf16.msra.mxu0 0
        %1330 = vmatpush.bf16.msra.mxu0 0
        %1331 = vmatpush.bf16.msra.mxu0 0
        %1332 = vmatpush.bf16.msra.mxu0 0
        %1333 = vmatpush.bf16.msra.mxu0 0
        %1334 = vmatpush.bf16.msra.mxu0 %v1312
        %1335 = vmatmul.bf16.gmra.mxu0 %v1306
        %v1336 = vpop.f32.mrf.mxu0
        %v1337 = vadd.f32 0.0, %v1336
        %v1338 = vpop.f32.mrf.mxu0
        %1339 = vdwg.mxu0
        %v1340 = vadd.f32 %v1290, %v1324
        %v1341 = vadd.f32 %v1291, %v1337
        %s1342 = scalar_lea.vmem %s2, 96
        %v1343 = vld [vmem:[%s1342] sm:$0xf]
        %v1345 = vsel %vm368, %v1343, 0
        %v1348 = vsel %vm372, %v1296, 0
        %1350 = vmatpush.bf16.msra.mxu0 0
        %1351 = vmatpush.bf16.msra.mxu0 0
        %1352 = vmatpush.bf16.msra.mxu0 0
        %1353 = vmatpush.bf16.msra.mxu0 0
        %1354 = vmatpush.bf16.msra.mxu0 0
        %1355 = vmatpush.bf16.msra.mxu0 0
        %1356 = vmatpush.bf16.msra.mxu0 0
        %1357 = vmatpush.bf16.msra.mxu0 %v1262
        %1358 = vmatmul.bf16.gmra.mxu0 %v1345
        %v1359 = vpop.f32.mrf.mxu0
        %v1360 = vadd.f32 0.0, %v1359
        %v1361 = vpop.f32.mrf.mxu0
        %1362 = vdwg.mxu0
        %1363 = vmatpush.bf16.msra.mxu0 0
        %1364 = vmatpush.bf16.msra.mxu0 0
        %1365 = vmatpush.bf16.msra.mxu0 0
        %1366 = vmatpush.bf16.msra.mxu0 0
        %1367 = vmatpush.bf16.msra.mxu0 0
        %1368 = vmatpush.bf16.msra.mxu0 0
        %1369 = vmatpush.bf16.msra.mxu0 0
        %1370 = vmatpush.bf16.msra.mxu0 %v1348
        %1371 = vmatmul.bf16.gmra.mxu0 %v1345
        %v1372 = vpop.f32.mrf.mxu0
        %v1373 = vadd.f32 0.0, %v1372
        %v1374 = vpop.f32.mrf.mxu0
        %1375 = vdwg.mxu0
        %v1376 = vadd.f32 %v1340, %v1360
        %v1377 = vadd.f32 %v1341, %v1373
        %1378 = vrot.lane.b32.xlu0 %v320, 120
        %v1379 = vpop.permute.xlu0 %1378
        %1380 = vrot.lane.b32.xlu0 %v321, 120
        %v1381 = vpop.permute.xlu0 %1380
        %1382 = vrot.lane.b32.xlu0 %v322, 120
        %v1383 = vpop.permute.xlu0 %1382
        %vm1384 = vcmp.lt.s32.totalorder %v330, 120
        %v1385 = vsel %vm1384, %v1381, %v1383
        %v1386 = vsel %vm1384, %v1379, %v1381
        %v1387 = vsel %vm1384, %v1383, %v1379
        %s1388 = scalar_lea.vmem %s4, 7
        %v1389 = vld [vmem:[%s1388] ss:$8 sm:$0x7]
        %v1391 = vperm.slane %v1389, 0
        %v1392 = vperm.slane %v1389, 1
        %v1393 = vperm.slane %v1389, 2
        %v1397 = vmul.f32 %v1386, %v1391
        %v1398 = vmul.f32 %v1385, %v1392
        %v1399 = vmul.f32 %v1387, %v1393
        %v1400 = vpack.c.bf16 %v1398, %v1397
        %v1401 = vpack.c.bf16 %v1399, %v1399
        %s1402 = scalar_lea.vmem %s2, 28
        %v1403 = vld [vmem:[%s1402] sm:$0xf]
        %v1405 = vunpack.c.l.b16 %v1400
        %v1406 = vunpack.c.h.b16 %v1400
        %v1407 = vpack.c.b16 %v1405, %v1405
        %v1408 = vpack.c.b16 %v1406, %v1406
        %v1410 = vsel %vm368, %v1403, 0
        %v1413 = vsel %vm372, %v1407, 0
        %v1416 = vsel %vm372, %v1408, 0
        %1418 = vmatpush.bf16.msra.mxu0 0
        %1419 = vmatpush.bf16.msra.mxu0 0
        %1420 = vmatpush.bf16.msra.mxu0 0
        %1421 = vmatpush.bf16.msra.mxu0 0
        %1422 = vmatpush.bf16.msra.mxu0 0
        %1423 = vmatpush.bf16.msra.mxu0 0
        %1424 = vmatpush.bf16.msra.mxu0 0
        %1425 = vmatpush.bf16.msra.mxu0 %v1413
        %1426 = vmatmul.bf16.gmra.mxu0 %v1410
        %v1427 = vpop.f32.mrf.mxu0
        %v1428 = vadd.f32 0.0, %v1427
        %v1429 = vpop.f32.mrf.mxu0
        %1430 = vdwg.mxu0
        %1431 = vmatpush.bf16.msra.mxu0 0
        %1432 = vmatpush.bf16.msra.mxu0 0
        %1433 = vmatpush.bf16.msra.mxu0 0
        %1434 = vmatpush.bf16.msra.mxu0 0
        %1435 = vmatpush.bf16.msra.mxu0 0
        %1436 = vmatpush.bf16.msra.mxu0 0
        %1437 = vmatpush.bf16.msra.mxu0 0
        %1438 = vmatpush.bf16.msra.mxu0 %v1416
        %1439 = vmatmul.bf16.gmra.mxu0 %v1410
        %v1440 = vpop.f32.mrf.mxu0
        %v1441 = vadd.f32 0.0, %v1440
        %v1442 = vpop.f32.mrf.mxu0
        %1443 = vdwg.mxu0
        %v1444 = vadd.f32 %v1376, %v1428
        %v1445 = vadd.f32 %v1377, %v1441
        %s1446 = scalar_lea.vmem %s2, 64
        %v1447 = vld [vmem:[%s1446] sm:$0xf]
        %v1449 = vunpack.c.l.b16 %v1401
        %v1450 = vpack.c.b16 %v1449, %v1449
        %1451 = vrot.lane.b32.xlu0 %v1407, 64
        %v1452 = vpop.permute.xlu0 %1451
        %1453 = vrot.lane.b32.xlu0 %v1408, 64
        %v1454 = vpop.permute.xlu0 %1453
        %1455 = vrot.lane.b32.xlu0 %v1450, 64
        %v1456 = vpop.permute.xlu0 %1455
        %v1457 = vsel %vm365, %v1452, %v1454
        %v1458 = vsel %vm365, %v1454, %v1456
        %v1460 = vsel %vm368, %v1447, 0
        %v1463 = vsel %vm372, %v1457, 0
        %v1466 = vsel %vm372, %v1458, 0
        %1468 = vmatpush.bf16.msra.mxu0 0
        %1469 = vmatpush.bf16.msra.mxu0 0
        %1470 = vmatpush.bf16.msra.mxu0 0
        %1471 = vmatpush.bf16.msra.mxu0 0
        %1472 = vmatpush.bf16.msra.mxu0 0
        %1473 = vmatpush.bf16.msra.mxu0 0
        %1474 = vmatpush.bf16.msra.mxu0 0
        %1475 = vmatpush.bf16.msra.mxu0 %v1463
        %1476 = vmatmul.bf16.gmra.mxu0 %v1460
        %v1477 = vpop.f32.mrf.mxu0
        %v1478 = vadd.f32 0.0, %v1477
        %v1479 = vpop.f32.mrf.mxu0
        %1480 = vdwg.mxu0
        %1481 = vmatpush.bf16.msra.mxu0 0
        %1482 = vmatpush.bf16.msra.mxu0 0
        %1483 = vmatpush.bf16.msra.mxu0 0
        %1484 = vmatpush.bf16.msra.mxu0 0
        %1485 = vmatpush.bf16.msra.mxu0 0
        %1486 = vmatpush.bf16.msra.mxu0 0
        %1487 = vmatpush.bf16.msra.mxu0 0
        %1488 = vmatpush.bf16.msra.mxu0 %v1466
        %1489 = vmatmul.bf16.gmra.mxu0 %v1460
        %v1490 = vpop.f32.mrf.mxu0
        %v1491 = vadd.f32 0.0, %v1490
        %v1492 = vpop.f32.mrf.mxu0
        %1493 = vdwg.mxu0
        %v1494 = vadd.f32 %v1444, %v1478
        %v1495 = vadd.f32 %v1445, %v1491
        %s1496 = scalar_lea.vmem %s2, 100
        %v1497 = vld [vmem:[%s1496] sm:$0xf]
        %v1499 = vsel %vm368, %v1497, 0
        %v1502 = vsel %vm372, %v1450, 0
        %1504 = vmatpush.bf16.msra.mxu0 0
        %1505 = vmatpush.bf16.msra.mxu0 0
        %1506 = vmatpush.bf16.msra.mxu0 0
        %1507 = vmatpush.bf16.msra.mxu0 0
        %1508 = vmatpush.bf16.msra.mxu0 0
        %1509 = vmatpush.bf16.msra.mxu0 0
        %1510 = vmatpush.bf16.msra.mxu0 0
        %1511 = vmatpush.bf16.msra.mxu0 %v1416
        %1512 = vmatmul.bf16.gmra.mxu0 %v1499
        %v1513 = vpop.f32.mrf.mxu0
        %v1514 = vadd.f32 0.0, %v1513
        %v1515 = vpop.f32.mrf.mxu0
        %1516 = vdwg.mxu0
        %1517 = vmatpush.bf16.msra.mxu0 0
        %1518 = vmatpush.bf16.msra.mxu0 0
        %1519 = vmatpush.bf16.msra.mxu0 0
        %1520 = vmatpush.bf16.msra.mxu0 0
        %1521 = vmatpush.bf16.msra.mxu0 0
        %1522 = vmatpush.bf16.msra.mxu0 0
        %1523 = vmatpush.bf16.msra.mxu0 0
        %1524 = vmatpush.bf16.msra.mxu0 %v1502
        %1525 = vmatmul.bf16.gmra.mxu0 %v1499
        %v1526 = vpop.f32.mrf.mxu0
        %v1527 = vadd.f32 0.0, %v1526
        %v1528 = vpop.f32.mrf.mxu0
        %1529 = vdwg.mxu0
        %v1530 = vadd.f32 %v1494, %v1514
        %v1531 = vadd.f32 %v1495, %v1527
        %1532 = vrot.lane.b32.xlu0 %v320, 119
        %v1533 = vpop.permute.xlu0 %1532
        %1534 = vrot.lane.b32.xlu0 %v321, 119
        %v1535 = vpop.permute.xlu0 %1534
        %1536 = vrot.lane.b32.xlu0 %v322, 119
        %v1537 = vpop.permute.xlu0 %1536
        %vm1538 = vcmp.lt.s32.totalorder %v330, 119
        %v1539 = vsel %vm1538, %v1535, %v1537
        %v1540 = vsel %vm1538, %v1533, %v1535
        %v1541 = vsel %vm1538, %v1537, %v1533
        %s1542 = scalar_lea.vmem %s4, 24
        %v1543 = vld [vmem:[%s1542] ss:$8 sm:$0x7]
        %v1545 = vperm.slane %v1543, 0
        %v1546 = vperm.slane %v1543, 1
        %v1547 = vperm.slane %v1543, 2
        %v1551 = vmul.f32 %v1540, %v1545
        %v1552 = vmul.f32 %v1539, %v1546
        %v1553 = vmul.f32 %v1541, %v1547
        %v1554 = vpack.c.bf16 %v1552, %v1551
        %v1555 = vpack.c.bf16 %v1553, %v1553
        %s1556 = scalar_lea.vmem %s2, 32
        %v1557 = vld [vmem:[%s1556] sm:$0xf]
        %v1559 = vunpack.c.l.b16 %v1554
        %v1560 = vunpack.c.h.b16 %v1554
        %v1561 = vpack.c.b16 %v1559, %v1559
        %v1562 = vpack.c.b16 %v1560, %v1560
        %v1564 = vsel %vm368, %v1557, 0
        %v1567 = vsel %vm372, %v1561, 0
        %v1570 = vsel %vm372, %v1562, 0
        %1572 = vmatpush.bf16.msra.mxu0 0
        %1573 = vmatpush.bf16.msra.mxu0 0
        %1574 = vmatpush.bf16.msra.mxu0 0
        %1575 = vmatpush.bf16.msra.mxu0 0
        %1576 = vmatpush.bf16.msra.mxu0 0
        %1577 = vmatpush.bf16.msra.mxu0 0
        %1578 = vmatpush.bf16.msra.mxu0 0
        %1579 = vmatpush.bf16.msra.mxu0 %v1567
        %1580 = vmatmul.bf16.gmra.mxu0 %v1564
        %v1581 = vpop.f32.mrf.mxu0
        %v1582 = vadd.f32 0.0, %v1581
        %v1583 = vpop.f32.mrf.mxu0
        %1584 = vdwg.mxu0
        %1585 = vmatpush.bf16.msra.mxu0 0
        %1586 = vmatpush.bf16.msra.mxu0 0
        %1587 = vmatpush.bf16.msra.mxu0 0
        %1588 = vmatpush.bf16.msra.mxu0 0
        %1589 = vmatpush.bf16.msra.mxu0 0
        %1590 = vmatpush.bf16.msra.mxu0 0
        %1591 = vmatpush.bf16.msra.mxu0 0
        %1592 = vmatpush.bf16.msra.mxu0 %v1570
        %1593 = vmatmul.bf16.gmra.mxu0 %v1564
        %v1594 = vpop.f32.mrf.mxu0
        %v1595 = vadd.f32 0.0, %v1594
        %v1596 = vpop.f32.mrf.mxu0
        %1597 = vdwg.mxu0
        %v1598 = vadd.f32 %v1530, %v1582
        %v1599 = vadd.f32 %v1531, %v1595
        %s1600 = scalar_lea.vmem %s2, 68
        %v1601 = vld [vmem:[%s1600] sm:$0xf]
        %v1603 = vunpack.c.l.b16 %v1555
        %v1604 = vpack.c.b16 %v1603, %v1603
        %1605 = vrot.lane.b32.xlu0 %v1561, 64
        %v1606 = vpop.permute.xlu0 %1605
        %1607 = vrot.lane.b32.xlu0 %v1562, 64
        %v1608 = vpop.permute.xlu0 %1607
        %1609 = vrot.lane.b32.xlu0 %v1604, 64
        %v1610 = vpop.permute.xlu0 %1609
        %v1611 = vsel %vm365, %v1606, %v1608
        %v1612 = vsel %vm365, %v1608, %v1610
        %v1614 = vsel %vm368, %v1601, 0
        %v1617 = vsel %vm372, %v1611, 0
        %v1620 = vsel %vm372, %v1612, 0
        %1622 = vmatpush.bf16.msra.mxu0 0
        %1623 = vmatpush.bf16.msra.mxu0 0
        %1624 = vmatpush.bf16.msra.mxu0 0
        %1625 = vmatpush.bf16.msra.mxu0 0
        %1626 = vmatpush.bf16.msra.mxu0 0
        %1627 = vmatpush.bf16.msra.mxu0 0
        %1628 = vmatpush.bf16.msra.mxu0 0
        %1629 = vmatpush.bf16.msra.mxu0 %v1617
        %1630 = vmatmul.bf16.gmra.mxu0 %v1614
        %v1631 = vpop.f32.mrf.mxu0
        %v1632 = vadd.f32 0.0, %v1631
        %v1633 = vpop.f32.mrf.mxu0
        %1634 = vdwg.mxu0
        %1635 = vmatpush.bf16.msra.mxu0 0
        %1636 = vmatpush.bf16.msra.mxu0 0
        %1637 = vmatpush.bf16.msra.mxu0 0
        %1638 = vmatpush.bf16.msra.mxu0 0
        %1639 = vmatpush.bf16.msra.mxu0 0
        %1640 = vmatpush.bf16.msra.mxu0 0
        %1641 = vmatpush.bf16.msra.mxu0 0
        %1642 = vmatpush.bf16.msra.mxu0 %v1620
        %1643 = vmatmul.bf16.gmra.mxu0 %v1614
        %v1644 = vpop.f32.mrf.mxu0
        %v1645 = vadd.f32 0.0, %v1644
        %v1646 = vpop.f32.mrf.mxu0
        %1647 = vdwg.mxu0
        %v1648 = vadd.f32 %v1598, %v1632
        %v1649 = vadd.f32 %v1599, %v1645
        %s1650 = scalar_lea.vmem %s2, 104
        %v1651 = vld [vmem:[%s1650] sm:$0xf]
        %v1653 = vsel %vm368, %v1651, 0
        %v1656 = vsel %vm372, %v1604, 0
        %1658 = vmatpush.bf16.msra.mxu0 0
        %1659 = vmatpush.bf16.msra.mxu0 0
        %1660 = vmatpush.bf16.msra.mxu0 0
        %1661 = vmatpush.bf16.msra.mxu0 0
        %1662 = vmatpush.bf16.msra.mxu0 0
        %1663 = vmatpush.bf16.msra.mxu0 0
        %1664 = vmatpush.bf16.msra.mxu0 0
        %1665 = vmatpush.bf16.msra.mxu0 %v1570
        %1666 = vmatmul.bf16.gmra.mxu0 %v1653
        %v1667 = vpop.f32.mrf.mxu0
        %v1668 = vadd.f32 0.0, %v1667
        %v1669 = vpop.f32.mrf.mxu0
        %1670 = vdwg.mxu0
        %1671 = vmatpush.bf16.msra.mxu0 0
        %1672 = vmatpush.bf16.msra.mxu0 0
        %1673 = vmatpush.bf16.msra.mxu0 0
        %1674 = vmatpush.bf16.msra.mxu0 0
        %1675 = vmatpush.bf16.msra.mxu0 0
        %1676 = vmatpush.bf16.msra.mxu0 0
        %1677 = vmatpush.bf16.msra.mxu0 0
        %1678 = vmatpush.bf16.msra.mxu0 %v1656
        %1679 = vmatmul.bf16.gmra.mxu0 %v1653
        %v1680 = vpop.f32.mrf.mxu0
        %v1681 = vadd.f32 0.0, %v1680
        %v1682 = vpop.f32.mrf.mxu0
        %1683 = vdwg.mxu0
        %v1684 = vadd.f32 %v1648, %v1668
        %v1685 = vadd.f32 %v1649, %v1681
        %vm1686 = vcmp.gt.f32.partialorder %v1684, 0.0
        %vm1687 = vcmp.gt.f32.partialorder %v1685, 0.0
        %v1688 = vmul.f32 %v1684, 0.2
        %v1689 = vmul.f32 %v1685, 0.2
        %v1690 = vsel %vm1686, %v1684, %v1688
        %v1691 = vsel %vm1687, %v1685, %v1689
        %v1692 = vld [vmem:[%s3] sm:$0x3]
        %v1693 = vpack.c.bf16 %v1690, %v1690
        %v1694 = vpack.c.bf16 %v1691, %v1691
        %v1696 = vsel %vm368, %v1692, 0
        %v1699 = vsel %vm372, %v1693, 0
        %v1702 = vsel %vm372, %v1694, 0
        %1704 = vmatpush.bf16.msra.mxu0 0
        %1705 = vmatpush.bf16.msra.mxu0 0
        %1706 = vmatpush.bf16.msra.mxu0 0
        %1707 = vmatpush.bf16.msra.mxu0 0
        %1708 = vmatpush.bf16.msra.mxu0 0
        %1709 = vmatpush.bf16.msra.mxu0 0
        %1710 = vmatpush.bf16.msra.mxu0 0
        %1711 = vmatpush.bf16.msra.mxu0 %v1699
        %1712 = vmatmul.bf16.gmra.mxu0 %v1696
        %v1713 = vpop.f32.mrf.mxu0
        %v1714 = vadd.f32 0.0, %v1713
        %v1715 = vpop.f32.mrf.mxu0
        %1716 = vdwg.mxu0
        %1717 = vmatpush.bf16.msra.mxu0 0
        %1718 = vmatpush.bf16.msra.mxu0 0
        %1719 = vmatpush.bf16.msra.mxu0 0
        %1720 = vmatpush.bf16.msra.mxu0 0
        %1721 = vmatpush.bf16.msra.mxu0 0
        %1722 = vmatpush.bf16.msra.mxu0 0
        %1723 = vmatpush.bf16.msra.mxu0 0
        %1724 = vmatpush.bf16.msra.mxu0 %v1702
        %1725 = vmatmul.bf16.gmra.mxu0 %v1696
        %v1726 = vpop.f32.mrf.mxu0
        %v1727 = vadd.f32 0.0, %v1726
        %v1728 = vpop.f32.mrf.mxu0
        %1729 = vdwg.mxu0
        %vm1730 = vcmp.gt.f32.partialorder %v1714, 0.0
        %vm1731 = vcmp.gt.f32.partialorder %v1727, 0.0
        %v1732 = vmul.f32 %v1714, 0.2
        %v1733 = vmul.f32 %v1727, 0.2
        %v1734 = vsel %vm1730, %v1714, %v1732
        %v1735 = vsel %vm1731, %v1727, %v1733
        %v1738 = vrot.slane %v1735, 4
        %v1739 = vsel %vm372, %v1734, %v1738
        %1740 = vrot.lane.b32.xlu0 %v1739, 64
        %v1741 = vpop.permute.xlu0 %1740
        %v1742 = vrot.slane %v1741, 4
        %vm1743 = vcmask 523264
        %v1744 = vsel %vm1743, %v1742, %v1741
        %v1747 = vadd.f32 %v244, %v1744
        %v1748 = vadd.f32 %v245, %v1742
        %1751 = vrot.lane.b32.xlu0 %v1747, 64
        %v1752 = vpop.permute.xlu0 %1751
        %1753 = vrot.lane.b32.xlu0 %v1748, 64
        %v1754 = vpop.permute.xlu0 %1753
        %v1755 = vrot.slane %v1752, 4
        %v1756 = vrot.slane %v1754, 4
        %v1757 = vsel %vm372, %v1755, %v1756
        %v1758 = vsel %vm1743, %v1752, %v1757
        %1760 = vst [vmem:[%s231] sm:$0xff] %v1758
        %s1761 = sand.u32 %s151, 1
        %s1762 = scalar_lea.sflag [#allocation3], %s1761
        %s1763 = sand.u32 %s151, 1
        %s1764 = smul.addr %s1763, 8
        %s1765 = scalar_lea.vmem [#allocation2], %s1764
        // Predicated region
        $region41: #{tpu_custom_call.1} parent=39 // pred_check
          %p1766 = pneg %p161
        $region42: #{tpu_custom_call.1} parent=39 // pred_check_branch
          %1768 = sbr.rel (%p1766) target = $region44
        $region43: #{tpu_custom_call.1} parent=39 // pred_region
          %s1769 = smul.u32 2, %s24
          %1771 = vsyncadd %s1762, 0
          %s1772 = smul.addr %s23, 4
          %s1773 = sadd.s32 %s1769, %s1772
          %s1774 = smul.addr %s1773, 4
          %s1775 = scalar_lea.hbm %s5, %s1774
          %s1777 = sshll.u32 %s1765, 4
          %s1778 = int_to_ptr.vmem [resolvable:$true] %s1777
          %s1779 = sshll.u32 %s1775, 4
          %s1780 = int_to_ptr.hbm [resolvable:$true] %s1779
          %1782 = dma.vmem_to_hbm [thread:$0]  %s1778, 128, %s1780, %s1762
        $region44: #{tpu_custom_call.1} parent=39 // pred_fallthru
          _
      $region40: #{tpu_custom_call.1} parent=5 // pred_fallthru
        _
      %p1783 = scmp.le.s32.totalorder 2, %s14
      // Predicated region
      $region45: #{tpu_custom_call.1} parent=5 // pred_check
        %p1784 = pneg %p1783
      $region46: #{tpu_custom_call.1} parent=5 // pred_check_branch
        %1786 = sbr.rel (%p1784) target = $region48
      $region47: #{tpu_custom_call.1} parent=5 // pred_region
        %s1787 = ssub.s32 %s14, 2
        // Predicated region
        $region49: #{tpu_custom_call.1} parent=47 // pred_check
          %p1788 = pneg %p167
        $region50: #{tpu_custom_call.1} parent=47 // pred_check_branch
          %1790 = sbr.rel (%p1788) target = $region52
        $region51: #{tpu_custom_call.1} parent=47 // pred_region
          %s1791 = sand.u32 %s152, 1
          %s1792 = scalar_lea.sflag [#allocation3], %s1791
          %s1793 = sand.u32 %s152, 1
          %s1794 = smul.addr %s1793, 8
          %s1795 = scalar_lea.vmem [#allocation2], %s1794
          %1797 = dma.done %s1792, 128
        $region52: #{tpu_custom_call.1} parent=47 // pred_fallthru
          _
      $region48: #{tpu_custom_call.1} parent=5 // pred_fallthru
        _
    $region6: #{tpu_custom_call.1} parent=1 // loop_footer
      %s18 = sadd.s32 1, %s14
    $region7: #{tpu_custom_call.1} parent=1 // loop_footer_branch
      %13 = sbr.rel target = $region3
    $region8: #{tpu_custom_call.1} parent=1 // loop_exit
      _
    %1798 = vsyncpa [#allocation3], 1
    %s1799 = scalar_lea.sflag [#allocation3], 1
    %1800 = vsyncpa %s1799, 1

</llo_original>
